<compile_context>
chip_gen: v7x
topology: tpu7x:2x2x1
jax: 0.10.0
libtpu: 0.0.40
codegen_flags: <defaults>
</compile_context>

<pallas_src>
import jax
import jax.numpy as jnp
from jax.experimental import pallas as pl
from jax.experimental.pallas import tpu as pltpu

HIDDEN = 768          # per-layer hidden size (Linear(768*4, ...) in the module)
NUM_CLASSES = 6       # classifier output width
NUM_REG = 30          # regressor output width (reshaped to (-1, 6, 5))
OUT_PAD = 128         # lane-dense padded output width (6 + 30 -> 128)
TB_MAX = 256          # max batch tile (rows per grid step)


def _round_up(x, m):
    return ((x + m - 1) // m) * m


def head_kernel(h1_ref, h2_ref, h3_ref, h4_ref, w_ref, b_ref, out_ref):
    """Fused classifier+regressor head on one (TB, 768)x4 CLS block.

    h*_ref : (TB, 768)   CLS features of the last four hidden states
    w_ref  : (3072, 128) fused, zero-padded weight (cols 0:6 classifier, 6:36 regressor)
    b_ref  : (1, 128)    fused, zero-padded bias (f32)
    out_ref: (TB, 128)   lane-dense f32 output (sigmoid applied to cols 0:6)
    """
    # Concat-free fused matmul: 4 accumulated dots over static 768-row slices of W.
    y = jnp.dot(h1_ref[...], w_ref[0 * HIDDEN:1 * HIDDEN, :],
                preferred_element_type=jnp.float32)
    y = y + jnp.dot(h2_ref[...], w_ref[1 * HIDDEN:2 * HIDDEN, :],
                    preferred_element_type=jnp.float32)
    y = y + jnp.dot(h3_ref[...], w_ref[2 * HIDDEN:3 * HIDDEN, :],
                    preferred_element_type=jnp.float32)
    y = y + jnp.dot(h4_ref[...], w_ref[3 * HIDDEN:4 * HIDDEN, :],
                    preferred_element_type=jnp.float32)
    y = y + b_ref[...]                                   # (TB,128) + (1,128) broadcast

    # Dropout(p=0.1) is identity at inference.
    # Sigmoid only on the classifier columns; regressor / padding columns pass through.
    col = jax.lax.broadcasted_iota(jnp.int32, y.shape, 1)
    out_ref[...] = jnp.where(col < NUM_CLASSES, jax.nn.sigmoid(y), y)


def custom_model_softmax_head(hidden_states, wc, bc, wr, br, *, use_bf16=False):
    """hidden_states: tuple of 4 arrays (B, S, H) = last four hidden states of the backbone.

    wc: (3072, 6), bc: (6,), wr: (3072, 30), br: (30,)  -- (in_features, out_features).
    Returns (sigmoid(classifier), regressor.reshape(-1, 6, 5)).
    """
    B, S, Hd = hidden_states[0].shape
    assert Hd == HIDDEN

    # --- CLS-only features: only the CLS row ever reaches the kernel / VMEM. ---
    cls = [h[:, 0, :] for h in hidden_states]            # 4 x (B, 768)

    # --- Fuse the two heads into one lane-dense, zero-padded weight/bias. ---
    w_fused = jnp.zeros((4 * HIDDEN, OUT_PAD), jnp.float32)
    w_fused = w_fused.at[:, :NUM_CLASSES].set(wc.astype(jnp.float32))
    w_fused = w_fused.at[:, NUM_CLASSES:NUM_CLASSES + NUM_REG].set(wr.astype(jnp.float32))
    b_fused = jnp.zeros((1, OUT_PAD), jnp.float32)
    b_fused = b_fused.at[:, :NUM_CLASSES].set(bc.astype(jnp.float32))
    b_fused = b_fused.at[:, NUM_CLASSES:NUM_CLASSES + NUM_REG].set(br.astype(jnp.float32))

    in_dtype = jnp.bfloat16 if use_bf16 else jnp.float32
    cls = [c.astype(in_dtype) for c in cls]
    w_k = w_fused.astype(in_dtype)                        # bias stays f32 (f32 epilogue)

    # --- Batch tiling: sublane-aligned tile TB, batch padded to a multiple of TB. ---
    TB = min(max(_round_up(B, 8), 8), TB_MAX)             # multiple of 8, capped
    Bp = _round_up(B, TB)
    if Bp != B:
        cls = [jnp.pad(c, ((0, Bp - B), (0, 0))) for c in cls]
    grid = (Bp // TB,)

    # --- Explicit VMEM budget for this tile plan (double-buffered blocks + weights). ---
    in_itemsize = 2 if use_bf16 else 4
    vmem_bytes = (4 * 2 * TB * HIDDEN * in_itemsize       # 4 CLS inputs, double-buffered
                  + 4 * HIDDEN * OUT_PAD * in_itemsize    # fused weight (grid-resident)
                  + OUT_PAD * 4                           # fused bias
                  + 2 * TB * OUT_PAD * 4)                 # output, double-buffered
    vmem_limit = max(2 * vmem_bytes, 4 << 20)             # ~2x headroom, >= 4 MiB

    out = pl.pallas_call(
        head_kernel,
        out_shape=jax.ShapeDtypeStruct((Bp, OUT_PAD), jnp.float32),
        grid=grid,
        in_specs=[pl.BlockSpec((TB, HIDDEN), lambda b: (b, 0)),   # h1 CLS block
                  pl.BlockSpec((TB, HIDDEN), lambda b: (b, 0)),   # h2
                  pl.BlockSpec((TB, HIDDEN), lambda b: (b, 0)),   # h3
                  pl.BlockSpec((TB, HIDDEN), lambda b: (b, 0)),   # h4
                  pl.BlockSpec((4 * HIDDEN, OUT_PAD), lambda b: (0, 0)),  # fused W
                  pl.BlockSpec((1, OUT_PAD), lambda b: (0, 0))],          # fused b
        out_specs=pl.BlockSpec((TB, OUT_PAD), lambda b: (b, 0)),
        compiler_params=pltpu.CompilerParams(
            dimension_semantics=("parallel",),
            vmem_limit_bytes=int(vmem_limit)),
    )(*cls, w_k, b_fused)

    out_c = out[:B, :NUM_CLASSES]                                  # (B, 6)  sigmoid applied
    out_r = out[:B, NUM_CLASSES:NUM_CLASSES + NUM_REG].reshape(-1, 6, 5)
    return out_c, out_r


def _reference(hidden_states, wc, bc, wr, br):
    feat = jnp.concatenate([h[:, 0, :] for h in hidden_states], axis=-1)
    out_c = jax.nn.sigmoid(feat @ wc + bc)
    out_r = (feat @ wr + br).reshape(-1, 6, 5)
    return out_c, out_r


if __name__ == "__main__":
    key = jax.random.PRNGKey(0)
    B, S = 2, 8   # small batch / sequence; hidden stays 768 to match Linear(768*4, ...)

    keys = jax.random.split(key, 8)
    # "Last four hidden states" of the (untranslated) backbone, supplied as inputs.
    hidden_states = tuple(
        jax.random.normal(keys[i], (B, S, HIDDEN), dtype=jnp.float32) for i in range(4)
    )

    # Deterministic parameter init (shapes from nn.Linear(768*4, 6) / nn.Linear(768*4, 30)),
    # stored as (in_features, out_features).
    wc = jax.random.normal(keys[4], (4 * HIDDEN, NUM_CLASSES), dtype=jnp.float32) * 0.02
    bc = jax.random.normal(keys[5], (NUM_CLASSES,), dtype=jnp.float32) * 0.02
    wr = jax.random.normal(keys[6], (4 * HIDDEN, NUM_REG), dtype=jnp.float32) * 0.02
    br = jax.random.normal(keys[7], (NUM_REG,), dtype=jnp.float32) * 0.02

    out_c, out_r = custom_model_softmax_head(hidden_states, wc, bc, wr, br)
    out_c = jax.block_until_ready(out_c)
    out_r = jax.block_until_ready(out_r)

    ref_c, ref_r = _reference(hidden_states, wc, bc, wr, br)
    assert out_c.shape == (B, NUM_CLASSES)
    assert out_r.shape == (B, 6, 5)
    assert jnp.allclose(out_c, ref_c, atol=1e-5, rtol=1e-5)
    assert jnp.allclose(out_r, ref_r, atol=1e-4, rtol=1e-4)

    print("KERNEL_OK")
</pallas_src>

<mosaic_0001>
module attributes {stable_mosaic.version = 11 : i64} {
  func.func @head_kernel(%arg0: i32, %arg1: memref<8x768xf32, #tpu.memory_space<vmem>>, %arg2: memref<8x768xf32, #tpu.memory_space<vmem>>, %arg3: memref<8x768xf32, #tpu.memory_space<vmem>>, %arg4: memref<8x768xf32, #tpu.memory_space<vmem>>, %arg5: memref<3072x128xf32, #tpu.memory_space<vmem>>, %arg6: memref<1x128xf32, #tpu.memory_space<vmem>>, %arg7: memref<8x128xf32, #tpu.memory_space<vmem>>) attributes {dimension_semantics = [#tpu.dimension_semantics<parallel>], iteration_bounds = array<i64: 1>, scalar_prefetch = 0 : i64, scratch_operands = 0 : i64, tpu.core_type = #tpu.core_type<tc>, window_params = [{transform_indices = @transform_0, window_bounds = array<i64: 8, 768>}, {transform_indices = @transform_1, window_bounds = array<i64: 8, 768>}, {transform_indices = @transform_2, window_bounds = array<i64: 8, 768>}, {transform_indices = @transform_3, window_bounds = array<i64: 8, 768>}, {pipeline_mode = #tpu.pipeline_mode<synchronous>, transform_indices = @transform_4, window_bounds = array<i64: 3072, 128>}, {pipeline_mode = #tpu.pipeline_mode<synchronous>, transform_indices = @transform_5, window_bounds = array<i64: 1, 128>}, {transform_indices = @transform_6, window_bounds = array<i64: 8, 128>}]} {
    %c0 = arith.constant 0 : index
    %c0_0 = arith.constant 0 : index
    %0 = vector.load %arg1[%c0, %c0_0] : memref<8x768xf32, #tpu.memory_space<vmem>>, vector<8x768xf32>
    %c0_1 = arith.constant 0 : index
    %c0_2 = arith.constant 0 : index
    %1 = vector.load %arg5[%c0_1, %c0_2] : memref<3072x128xf32, #tpu.memory_space<vmem>>, vector<768x128xf32>
    %cst = arith.constant dense<0.000000e+00> : vector<8x128xf32>
    %2 = tpu.matmul %0, %1, %cst {dimension_numbers = #tpu.dot_dimension_numbers<[1], [0], [0], [1], [0, 0, 1, 1], [], []>} : vector<8x768xf32>, vector<768x128xf32>, vector<8x128xf32> -> vector<8x128xf32>
    %c0_3 = arith.constant 0 : index
    %c0_4 = arith.constant 0 : index
    %3 = vector.load %arg2[%c0_3, %c0_4] : memref<8x768xf32, #tpu.memory_space<vmem>>, vector<8x768xf32>
    %c768 = arith.constant 768 : index
    %c0_5 = arith.constant 0 : index
    %4 = vector.load %arg5[%c768, %c0_5] : memref<3072x128xf32, #tpu.memory_space<vmem>>, vector<768x128xf32>
    %cst_6 = arith.constant dense<0.000000e+00> : vector<8x128xf32>
    %5 = tpu.matmul %3, %4, %cst_6 {dimension_numbers = #tpu.dot_dimension_numbers<[1], [0], [0], [1], [0, 0, 1, 1], [], []>} : vector<8x768xf32>, vector<768x128xf32>, vector<8x128xf32> -> vector<8x128xf32>
    %6 = arith.addf %2, %5 : vector<8x128xf32>
    %c0_7 = arith.constant 0 : index
    %c0_8 = arith.constant 0 : index
    %7 = vector.load %arg3[%c0_7, %c0_8] : memref<8x768xf32, #tpu.memory_space<vmem>>, vector<8x768xf32>
    %c1536 = arith.constant 1536 : index
    %c0_9 = arith.constant 0 : index
    %8 = vector.load %arg5[%c1536, %c0_9] : memref<3072x128xf32, #tpu.memory_space<vmem>>, vector<768x128xf32>
    %cst_10 = arith.constant dense<0.000000e+00> : vector<8x128xf32>
    %9 = tpu.matmul %7, %8, %cst_10 {dimension_numbers = #tpu.dot_dimension_numbers<[1], [0], [0], [1], [0, 0, 1, 1], [], []>} : vector<8x768xf32>, vector<768x128xf32>, vector<8x128xf32> -> vector<8x128xf32>
    %10 = arith.addf %6, %9 : vector<8x128xf32>
    %c0_11 = arith.constant 0 : index
    %c0_12 = arith.constant 0 : index
    %11 = vector.load %arg4[%c0_11, %c0_12] : memref<8x768xf32, #tpu.memory_space<vmem>>, vector<8x768xf32>
    %c2304 = arith.constant 2304 : index
    %c0_13 = arith.constant 0 : index
    %12 = vector.load %arg5[%c2304, %c0_13] : memref<3072x128xf32, #tpu.memory_space<vmem>>, vector<768x128xf32>
    %cst_14 = arith.constant dense<0.000000e+00> : vector<8x128xf32>
    %13 = tpu.matmul %11, %12, %cst_14 {dimension_numbers = #tpu.dot_dimension_numbers<[1], [0], [0], [1], [0, 0, 1, 1], [], []>} : vector<8x768xf32>, vector<768x128xf32>, vector<8x128xf32> -> vector<8x128xf32>
    %14 = arith.addf %10, %13 : vector<8x128xf32>
    %c0_15 = arith.constant 0 : index
    %c0_16 = arith.constant 0 : index
    %15 = vector.load %arg6[%c0_15, %c0_16] : memref<1x128xf32, #tpu.memory_space<vmem>>, vector<1x128xf32>
    %16 = vector.broadcast %15 : vector<1x128xf32> to vector<8x128xf32>
    %17 = arith.addf %14, %16 : vector<8x128xf32>
    %18 = tpu.iota {dimensions = array<i32: 1>} : vector<8x128xi32>
    %c6_i32 = arith.constant 6 : i32
    %19 = vector.broadcast %c6_i32 : i32 to vector<8x128xi32>
    %20 = arith.cmpi slt, %18, %19 : vector<8x128xi32>
    %21 = arith.negf %17 : vector<8x128xf32>
    %22 = math.exp %21 : vector<8x128xf32>
    %cst_17 = arith.constant 1.000000e+00 : f32
    %23 = vector.broadcast %cst_17 : f32 to vector<8x128xf32>
    %24 = arith.addf %23, %22 : vector<8x128xf32>
    %25 = arith.divf %23, %24 : vector<8x128xf32>
    %26 = arith.select %20, %25, %17 : vector<8x128xi1>, vector<8x128xf32>
    %c0_18 = arith.constant 0 : index
    %c0_19 = arith.constant 0 : index
    %27 = vector.load %arg7[%c0_18, %c0_19] : memref<8x128xf32, #tpu.memory_space<vmem>>, vector<8x128xf32>
    tpu.vector_store %arg7[%c0_18, %c0_19], %26 {strides = array<i32>} : memref<8x128xf32, #tpu.memory_space<vmem>>, vector<8x128xf32>,
    return
  }
  func.func @transform_0(%arg0: i32) -> (i32, i32) {
    %c0_i32 = arith.constant 0 : i32
    %c0_i32_0 = arith.constant 0 : i32
    return %arg0, %c0_i32 : i32, i32
  }
  func.func @transform_1(%arg0: i32) -> (i32, i32) {
    %c0_i32 = arith.constant 0 : i32
    %c0_i32_0 = arith.constant 0 : i32
    return %arg0, %c0_i32 : i32, i32
  }
  func.func @transform_2(%arg0: i32) -> (i32, i32) {
    %c0_i32 = arith.constant 0 : i32
    %c0_i32_0 = arith.constant 0 : i32
    return %arg0, %c0_i32 : i32, i32
  }
  func.func @transform_3(%arg0: i32) -> (i32, i32) {
    %c0_i32 = arith.constant 0 : i32
    %c0_i32_0 = arith.constant 0 : i32
    return %arg0, %c0_i32 : i32, i32
  }
  func.func @transform_4(%arg0: i32) -> (i32, i32) {
    %c0_i32 = arith.constant 0 : i32
    %c0_i32_0 = arith.constant 0 : i32
    %c0_i32_1 = arith.constant 0 : i32
    return %c0_i32, %c0_i32_0 : i32, i32
  }
  func.func @transform_5(%arg0: i32) -> (i32, i32) {
    %c0_i32 = arith.constant 0 : i32
    %c0_i32_0 = arith.constant 0 : i32
    %c0_i32_1 = arith.constant 0 : i32
    return %c0_i32, %c0_i32_0 : i32, i32
  }
  func.func @transform_6(%arg0: i32) -> (i32, i32) {
    %c0_i32 = arith.constant 0 : i32
    %c0_i32_0 = arith.constant 0 : i32
    return %arg0, %c0_i32 : i32, i32
  }
}

</mosaic_0001>

<llo_original>
// kernel: tpu_custom_call.1
$region0: #{tpu_custom_call.1}
  #allocation0 [shape = 'u32[]', space=smem, size = 0x4, offset = 0x4, fixed_abs, tag = 'smem constant byte address 0x4 - core index']
  #allocation1 [shape = 'u32[144,128]{1,0:T(1,128)}', space=vmem, size = 0x12000, scoped, tag = 'internal scratch']
  %s0 = inlined_call_operand.hbm [shape: f32[8,768], index: 0, kind: input, shape index: {}]
  %s1 = inlined_call_operand.hbm [shape: f32[8,768], index: 1, kind: input, shape index: {}]
  %s2 = inlined_call_operand.hbm [shape: f32[8,768], index: 2, kind: input, shape index: {}]
  %s3 = inlined_call_operand.hbm [shape: f32[8,768], index: 3, kind: input, shape index: {}]
  %s4 = inlined_call_operand.hbm [shape: f32[3072,128], index: 4, kind: input, shape index: {}]
  %s5 = inlined_call_operand.hbm [shape: f32[1,128], index: 5, kind: input, shape index: {}]
  %s6 = inlined_call_operand.hbm [shape: f32[8,128], index: 6, kind: output, shape index: {}]
  %s7 = sld [smem:[#allocation0]]
  $region58: #{tpu_custom_call.1} parent=0
    _
  %s9 = ssub.s32 1, %s7
  %s10 = scalar_select 0, %s9, %s7
  $region1: #{tpu_custom_call.1} parent=0
    #allocation2 [shape = 'u8[24576]{0}', space=vmem, size = 0x6000, scoped, tag = 'input window, operand 0, single buffered']
    #allocation3 [shape = 's32[1]{0}', space=sflag, size = 0x4, scoped, tag = 'scoped memory for tpu_custom_call.1']
    #allocation4 [shape = 's32[1]{0}', space=sflag, size = 0x4, scoped, tag = 'scoped memory for tpu_custom_call.1']
    #allocation5 [shape = 'u8[24576]{0}', space=vmem, size = 0x6000, scoped, tag = 'input window, operand 1, single buffered']
    #allocation6 [shape = 's32[1]{0}', space=sflag, size = 0x4, scoped, tag = 'scoped memory for tpu_custom_call.1']
    #allocation7 [shape = 'u8[24576]{0}', space=vmem, size = 0x6000, scoped, tag = 'input window, operand 2, single buffered']
    #allocation8 [shape = 'u8[24576]{0}', space=vmem, size = 0x6000, scoped, tag = 'input window, operand 3, single buffered']
    #allocation9 [shape = 's32[1]{0}', space=sflag, size = 0x4, scoped, tag = 'scoped memory for tpu_custom_call.1']
    #allocation10 [shape = 'u8[1572864]{0}', space=vmem, size = 0x180000, scoped, tag = 'input window, operand 4, single buffered']
    #allocation11 [shape = 'u8[512]{0}', space=vmem, size = 0x400, scoped, tag = 'input window, operand 5, single buffered']
    #allocation12 [shape = 's32[1]{0}', space=sflag, size = 0x4, scoped, tag = 'scoped memory for tpu_custom_call.1']
    #allocation13 [shape = 'u8[4096]{0}', space=vmem, size = 0x1000, scoped, tag = 'output window, operand 0, single buffered']
    %11 = vsyncpa [#allocation3], 0
    %12 = vsyncpa [#allocation6], 0
    %13 = vsyncpa [#allocation9], 0
    %14 = vsyncpa [#allocation12], 0
    %15 = vsyncpa [#allocation4], 0
    // Predicated region
    $region2: #{tpu_custom_call.1} parent=1 // pred_check
      _
    $region3: #{tpu_custom_call.1} parent=1 // pred_check_branch
      %17 = sbr.rel (0) target = $region5
    $region4: #{tpu_custom_call.1} parent=1 // pred_region
      %s19 = ssub.s32 768, 768
      %20 = vsyncadd [#allocation3], %s19
      %s22 = sshll.u32 [#allocation2], 4
      %s23 = int_to_ptr.vmem [resolvable:$true] %s22
      %25 = dma.hbm_to_vmem [thread:$0]  %s0, 768, %s23, [#allocation3]
    $region5: #{tpu_custom_call.1} parent=1 // pred_fallthru
      _
    // Predicated region
    $region6: #{tpu_custom_call.1} parent=1 // pred_check
      _
    $region7: #{tpu_custom_call.1} parent=1 // pred_check_branch
      %27 = sbr.rel (0) target = $region9
    $region8: #{tpu_custom_call.1} parent=1 // pred_region
      %s29 = ssub.s32 768, 768
      %30 = vsyncadd [#allocation6], %s29
      %s32 = sshll.u32 [#allocation5], 4
      %s33 = int_to_ptr.vmem [resolvable:$true] %s32
      %35 = dma.hbm_to_vmem [thread:$0]  %s1, 768, %s33, [#allocation6]
    $region9: #{tpu_custom_call.1} parent=1 // pred_fallthru
      _
    // Predicated region
    $region10: #{tpu_custom_call.1} parent=1 // pred_check
      _
    $region11: #{tpu_custom_call.1} parent=1 // pred_check_branch
      %37 = sbr.rel (0) target = $region13
    $region12: #{tpu_custom_call.1} parent=1 // pred_region
      %s39 = ssub.s32 768, 768
      %40 = vsyncadd [#allocation6], %s39
      %s42 = sshll.u32 [#allocation7], 4
      %s43 = int_to_ptr.vmem [resolvable:$true] %s42
      %45 = dma.hbm_to_vmem [thread:$0]  %s2, 768, %s43, [#allocation6]
    $region13: #{tpu_custom_call.1} parent=1 // pred_fallthru
      _
    // Predicated region
    $region14: #{tpu_custom_call.1} parent=1 // pred_check
      _
    $region15: #{tpu_custom_call.1} parent=1 // pred_check_branch
      %47 = sbr.rel (0) target = $region17
    $region16: #{tpu_custom_call.1} parent=1 // pred_region
      %s49 = ssub.s32 768, 768
      %50 = vsyncadd [#allocation9], %s49
      %s52 = sshll.u32 [#allocation8], 4
      %s53 = int_to_ptr.vmem [resolvable:$true] %s52
      %55 = dma.hbm_to_vmem [thread:$0]  %s3, 768, %s53, [#allocation9]
    $region17: #{tpu_custom_call.1} parent=1 // pred_fallthru
      _
    // Predicated region
    $region18: #{tpu_custom_call.1} parent=1 // pred_check
      _
    $region19: #{tpu_custom_call.1} parent=1 // pred_check_branch
      %57 = sbr.rel (0) target = $region21
    $region20: #{tpu_custom_call.1} parent=1 // pred_region
      %s59 = ssub.s32 49152, 49152
      %60 = vsyncadd [#allocation9], %s59
      %s61 = sshll.u32 [#allocation10], 4
      %s62 = int_to_ptr.vmem [resolvable:$true] %s61
      %67 = dma.hbm_to_vmem [thread:$0]  %s4, 49152, %s62, [#allocation9], 128, 128, 8
    $region21: #{tpu_custom_call.1} parent=1 // pred_fallthru
      _
    // Predicated region
    $region22: #{tpu_custom_call.1} parent=1 // pred_check
      _
    $region23: #{tpu_custom_call.1} parent=1 // pred_check_branch
      %69 = sbr.rel (0) target = $region25
    $region24: #{tpu_custom_call.1} parent=1 // pred_region
      %s71 = ssub.s32 16, 16
      %72 = vsyncadd [#allocation12], %s71
      %s74 = sshll.u32 [#allocation11], 4
      %s75 = int_to_ptr.vmem [resolvable:$true] %s74
      %77 = dma.hbm_to_vmem [thread:$0]  %s5, 16, %s75, [#allocation12]
    $region25: #{tpu_custom_call.1} parent=1 // pred_fallthru
      _
    // Predicated region
    $region26: #{tpu_custom_call.1} parent=1 // pred_check
      _
    $region27: #{tpu_custom_call.1} parent=1 // pred_check_branch
      %79 = sbr.rel (0) target = $region29
    $region28: #{tpu_custom_call.1} parent=1 // pred_region
      %80 = dma.done [#allocation3], 768
    $region29: #{tpu_custom_call.1} parent=1 // pred_fallthru
      _
    // Predicated region
    $region30: #{tpu_custom_call.1} parent=1 // pred_check
      _
    $region31: #{tpu_custom_call.1} parent=1 // pred_check_branch
      %82 = sbr.rel (0) target = $region33
    $region32: #{tpu_custom_call.1} parent=1 // pred_region
      %83 = dma.done [#allocation6], 768
    $region33: #{tpu_custom_call.1} parent=1 // pred_fallthru
      _
    // Predicated region
    $region34: #{tpu_custom_call.1} parent=1 // pred_check
      _
    $region35: #{tpu_custom_call.1} parent=1 // pred_check_branch
      %85 = sbr.rel (0) target = $region37
    $region36: #{tpu_custom_call.1} parent=1 // pred_region
      %86 = dma.done [#allocation6], 768
    $region37: #{tpu_custom_call.1} parent=1 // pred_fallthru
      _
    // Predicated region
    $region38: #{tpu_custom_call.1} parent=1 // pred_check
      _
    $region39: #{tpu_custom_call.1} parent=1 // pred_check_branch
      %88 = sbr.rel (0) target = $region41
    $region40: #{tpu_custom_call.1} parent=1 // pred_region
      %89 = dma.done [#allocation9], 768
    $region41: #{tpu_custom_call.1} parent=1 // pred_fallthru
      _
    // Predicated region
    $region42: #{tpu_custom_call.1} parent=1 // pred_check
      _
    $region43: #{tpu_custom_call.1} parent=1 // pred_check_branch
      %91 = sbr.rel (0) target = $region45
    $region44: #{tpu_custom_call.1} parent=1 // pred_region
      %92 = dma.done [#allocation9], 49152
    $region45: #{tpu_custom_call.1} parent=1 // pred_fallthru
      _
    // Predicated region
    $region46: #{tpu_custom_call.1} parent=1 // pred_check
      _
    $region47: #{tpu_custom_call.1} parent=1 // pred_check_branch
      %94 = sbr.rel (0) target = $region49
    $region48: #{tpu_custom_call.1} parent=1 // pred_region
      %95 = dma.done [#allocation12], 16
    $region49: #{tpu_custom_call.1} parent=1 // pred_fallthru
      _
    %v96 = vld [vmem:[#allocation2] sm:$0xff]
    %v97 = vld [vmem:[#allocation2 + $0x8] sm:$0xff]
    %v98 = vld [vmem:[#allocation2 + $0x10] sm:$0xff]
    %v99 = vld [vmem:[#allocation2 + $0x18] sm:$0xff]
    %v100 = vld [vmem:[#allocation2 + $0x20] sm:$0xff]
    %v101 = vld [vmem:[#allocation2 + $0x28] sm:$0xff]
    %v102 = vld [vmem:[#allocation10] sm:$0xff]
    %v103 = vld [vmem:[#allocation10 + $0x8] sm:$0xff]
    %v104 = vld [vmem:[#allocation10 + $0x10] sm:$0xff]
    %v105 = vld [vmem:[#allocation10 + $0x18] sm:$0xff]
    %v106 = vld [vmem:[#allocation10 + $0x20] sm:$0xff]
    %v107 = vld [vmem:[#allocation10 + $0x28] sm:$0xff]
    %v108 = vld [vmem:[#allocation10 + $0x30] sm:$0xff]
    %v109 = vld [vmem:[#allocation10 + $0x38] sm:$0xff]
    %v110 = vld [vmem:[#allocation10 + $0x40] sm:$0xff]
    %v111 = vld [vmem:[#allocation10 + $0x48] sm:$0xff]
    %v112 = vld [vmem:[#allocation10 + $0x50] sm:$0xff]
    %v113 = vld [vmem:[#allocation10 + $0x58] sm:$0xff]
    %v114 = vld [vmem:[#allocation10 + $0x60] sm:$0xff]
    %v115 = vld [vmem:[#allocation10 + $0x68] sm:$0xff]
    %v116 = vld [vmem:[#allocation10 + $0x70] sm:$0xff]
    %v117 = vld [vmem:[#allocation10 + $0x78] sm:$0xff]
    %v118 = vld [vmem:[#allocation10 + $0x80] sm:$0xff]
    %v119 = vld [vmem:[#allocation10 + $0x88] sm:$0xff]
    %v120 = vld [vmem:[#allocation10 + $0x90] sm:$0xff]
    %v121 = vld [vmem:[#allocation10 + $0x98] sm:$0xff]
    %v122 = vld [vmem:[#allocation10 + $0xa0] sm:$0xff]
    %v123 = vld [vmem:[#allocation10 + $0xa8] sm:$0xff]
    %v124 = vld [vmem:[#allocation10 + $0xb0] sm:$0xff]
    %v125 = vld [vmem:[#allocation10 + $0xb8] sm:$0xff]
    %v126 = vld [vmem:[#allocation10 + $0xc0] sm:$0xff]
    %v127 = vld [vmem:[#allocation10 + $0xc8] sm:$0xff]
    %v128 = vld [vmem:[#allocation10 + $0xd0] sm:$0xff]
    %v129 = vld [vmem:[#allocation10 + $0xd8] sm:$0xff]
    %v130 = vld [vmem:[#allocation10 + $0xe0] sm:$0xff]
    %v131 = vld [vmem:[#allocation10 + $0xe8] sm:$0xff]
    %v132 = vld [vmem:[#allocation10 + $0xf0] sm:$0xff]
    %v133 = vld [vmem:[#allocation10 + $0xf8] sm:$0xff]
    %v134 = vld [vmem:[#allocation10 + $0x100] sm:$0xff]
    %v135 = vld [vmem:[#allocation10 + $0x108] sm:$0xff]
    %v136 = vld [vmem:[#allocation10 + $0x110] sm:$0xff]
    %v137 = vld [vmem:[#allocation10 + $0x118] sm:$0xff]
    %v138 = vld [vmem:[#allocation10 + $0x120] sm:$0xff]
    %v139 = vld [vmem:[#allocation10 + $0x128] sm:$0xff]
    %v140 = vld [vmem:[#allocation10 + $0x130] sm:$0xff]
    %v141 = vld [vmem:[#allocation10 + $0x138] sm:$0xff]
    %v142 = vld [vmem:[#allocation10 + $0x140] sm:$0xff]
    %v143 = vld [vmem:[#allocation10 + $0x148] sm:$0xff]
    %v144 = vld [vmem:[#allocation10 + $0x150] sm:$0xff]
    %v145 = vld [vmem:[#allocation10 + $0x158] sm:$0xff]
    %v146 = vld [vmem:[#allocation10 + $0x160] sm:$0xff]
    %v147 = vld [vmem:[#allocation10 + $0x168] sm:$0xff]
    %v148 = vld [vmem:[#allocation10 + $0x170] sm:$0xff]
    %v149 = vld [vmem:[#allocation10 + $0x178] sm:$0xff]
    %v150 = vld [vmem:[#allocation10 + $0x180] sm:$0xff]
    %v151 = vld [vmem:[#allocation10 + $0x188] sm:$0xff]
    %v152 = vld [vmem:[#allocation10 + $0x190] sm:$0xff]
    %v153 = vld [vmem:[#allocation10 + $0x198] sm:$0xff]
    %v154 = vld [vmem:[#allocation10 + $0x1a0] sm:$0xff]
    %v155 = vld [vmem:[#allocation10 + $0x1a8] sm:$0xff]
    %v156 = vld [vmem:[#allocation10 + $0x1b0] sm:$0xff]
    %v157 = vld [vmem:[#allocation10 + $0x1b8] sm:$0xff]
    %v158 = vld [vmem:[#allocation10 + $0x1c0] sm:$0xff]
    %v159 = vld [vmem:[#allocation10 + $0x1c8] sm:$0xff]
    %v160 = vld [vmem:[#allocation10 + $0x1d0] sm:$0xff]
    %v161 = vld [vmem:[#allocation10 + $0x1d8] sm:$0xff]
    %v162 = vld [vmem:[#allocation10 + $0x1e0] sm:$0xff]
    %v163 = vld [vmem:[#allocation10 + $0x1e8] sm:$0xff]
    %v164 = vld [vmem:[#allocation10 + $0x1f0] sm:$0xff]
    %v165 = vld [vmem:[#allocation10 + $0x1f8] sm:$0xff]
    %v166 = vld [vmem:[#allocation10 + $0x200] sm:$0xff]
    %v167 = vld [vmem:[#allocation10 + $0x208] sm:$0xff]
    %v168 = vld [vmem:[#allocation10 + $0x210] sm:$0xff]
    %v169 = vld [vmem:[#allocation10 + $0x218] sm:$0xff]
    %v170 = vld [vmem:[#allocation10 + $0x220] sm:$0xff]
    %v171 = vld [vmem:[#allocation10 + $0x228] sm:$0xff]
    %v172 = vld [vmem:[#allocation10 + $0x230] sm:$0xff]
    %v173 = vld [vmem:[#allocation10 + $0x238] sm:$0xff]
    %v174 = vld [vmem:[#allocation10 + $0x240] sm:$0xff]
    %v175 = vld [vmem:[#allocation10 + $0x248] sm:$0xff]
    %v176 = vld [vmem:[#allocation10 + $0x250] sm:$0xff]
    %v177 = vld [vmem:[#allocation10 + $0x258] sm:$0xff]
    %v178 = vld [vmem:[#allocation10 + $0x260] sm:$0xff]
    %v179 = vld [vmem:[#allocation10 + $0x268] sm:$0xff]
    %v180 = vld [vmem:[#allocation10 + $0x270] sm:$0xff]
    %v181 = vld [vmem:[#allocation10 + $0x278] sm:$0xff]
    %v182 = vld [vmem:[#allocation10 + $0x280] sm:$0xff]
    %v183 = vld [vmem:[#allocation10 + $0x288] sm:$0xff]
    %v184 = vld [vmem:[#allocation10 + $0x290] sm:$0xff]
    %v185 = vld [vmem:[#allocation10 + $0x298] sm:$0xff]
    %v186 = vld [vmem:[#allocation10 + $0x2a0] sm:$0xff]
    %v187 = vld [vmem:[#allocation10 + $0x2a8] sm:$0xff]
    %v188 = vld [vmem:[#allocation10 + $0x2b0] sm:$0xff]
    %v189 = vld [vmem:[#allocation10 + $0x2b8] sm:$0xff]
    %v190 = vld [vmem:[#allocation10 + $0x2c0] sm:$0xff]
    %v191 = vld [vmem:[#allocation10 + $0x2c8] sm:$0xff]
    %v192 = vld [vmem:[#allocation10 + $0x2d0] sm:$0xff]
    %v193 = vld [vmem:[#allocation10 + $0x2d8] sm:$0xff]
    %v194 = vld [vmem:[#allocation10 + $0x2e0] sm:$0xff]
    %v195 = vld [vmem:[#allocation10 + $0x2e8] sm:$0xff]
    %v196 = vld [vmem:[#allocation10 + $0x2f0] sm:$0xff]
    %v197 = vld [vmem:[#allocation10 + $0x2f8] sm:$0xff]
    %v198 = vld [vmem:[#allocation5] sm:$0xff]
    %v199 = vld [vmem:[#allocation5 + $0x8] sm:$0xff]
    %v200 = vld [vmem:[#allocation5 + $0x10] sm:$0xff]
    %v201 = vld [vmem:[#allocation5 + $0x18] sm:$0xff]
    %v202 = vld [vmem:[#allocation5 + $0x20] sm:$0xff]
    %v203 = vld [vmem:[#allocation5 + $0x28] sm:$0xff]
    %v204 = vld [vmem:[#allocation10 + $0x300] sm:$0xff]
    %v205 = vld [vmem:[#allocation10 + $0x308] sm:$0xff]
    %v206 = vld [vmem:[#allocation10 + $0x310] sm:$0xff]
    %v207 = vld [vmem:[#allocation10 + $0x318] sm:$0xff]
    %v208 = vld [vmem:[#allocation10 + $0x320] sm:$0xff]
    %v209 = vld [vmem:[#allocation10 + $0x328] sm:$0xff]
    %v210 = vld [vmem:[#allocation10 + $0x330] sm:$0xff]
    %v211 = vld [vmem:[#allocation10 + $0x338] sm:$0xff]
    %v212 = vld [vmem:[#allocation10 + $0x340] sm:$0xff]
    %v213 = vld [vmem:[#allocation10 + $0x348] sm:$0xff]
    %v214 = vld [vmem:[#allocation10 + $0x350] sm:$0xff]
    %v215 = vld [vmem:[#allocation10 + $0x358] sm:$0xff]
    %v216 = vld [vmem:[#allocation10 + $0x360] sm:$0xff]
    %v217 = vld [vmem:[#allocation10 + $0x368] sm:$0xff]
    %v218 = vld [vmem:[#allocation10 + $0x370] sm:$0xff]
    %v219 = vld [vmem:[#allocation10 + $0x378] sm:$0xff]
    %v220 = vld [vmem:[#allocation10 + $0x380] sm:$0xff]
    %v221 = vld [vmem:[#allocation10 + $0x388] sm:$0xff]
    %v222 = vld [vmem:[#allocation10 + $0x390] sm:$0xff]
    %v223 = vld [vmem:[#allocation10 + $0x398] sm:$0xff]
    %v224 = vld [vmem:[#allocation10 + $0x3a0] sm:$0xff]
    %v225 = vld [vmem:[#allocation10 + $0x3a8] sm:$0xff]
    %v226 = vld [vmem:[#allocation10 + $0x3b0] sm:$0xff]
    %v227 = vld [vmem:[#allocation10 + $0x3b8] sm:$0xff]
    %v228 = vld [vmem:[#allocation10 + $0x3c0] sm:$0xff]
    %v229 = vld [vmem:[#allocation10 + $0x3c8] sm:$0xff]
    %v230 = vld [vmem:[#allocation10 + $0x3d0] sm:$0xff]
    %v231 = vld [vmem:[#allocation10 + $0x3d8] sm:$0xff]
    %v232 = vld [vmem:[#allocation10 + $0x3e0] sm:$0xff]
    %v233 = vld [vmem:[#allocation10 + $0x3e8] sm:$0xff]
    %v234 = vld [vmem:[#allocation10 + $0x3f0] sm:$0xff]
    %v235 = vld [vmem:[#allocation10 + $0x3f8] sm:$0xff]
    %v236 = vld [vmem:[#allocation10 + $0x400] sm:$0xff]
    %v237 = vld [vmem:[#allocation10 + $0x408] sm:$0xff]
    %v238 = vld [vmem:[#allocation10 + $0x410] sm:$0xff]
    %v239 = vld [vmem:[#allocation10 + $0x418] sm:$0xff]
    %v240 = vld [vmem:[#allocation10 + $0x420] sm:$0xff]
    %v241 = vld [vmem:[#allocation10 + $0x428] sm:$0xff]
    %v242 = vld [vmem:[#allocation10 + $0x430] sm:$0xff]
    %v243 = vld [vmem:[#allocation10 + $0x438] sm:$0xff]
    %v244 = vld [vmem:[#allocation10 + $0x440] sm:$0xff]
    %v245 = vld [vmem:[#allocation10 + $0x448] sm:$0xff]
    %v246 = vld [vmem:[#allocation10 + $0x450] sm:$0xff]
    %v247 = vld [vmem:[#allocation10 + $0x458] sm:$0xff]
    %v248 = vld [vmem:[#allocation10 + $0x460] sm:$0xff]
    %v249 = vld [vmem:[#allocation10 + $0x468] sm:$0xff]
    %v250 = vld [vmem:[#allocation10 + $0x470] sm:$0xff]
    %v251 = vld [vmem:[#allocation10 + $0x478] sm:$0xff]
    %v252 = vld [vmem:[#allocation10 + $0x480] sm:$0xff]
    %v253 = vld [vmem:[#allocation10 + $0x488] sm:$0xff]
    %v254 = vld [vmem:[#allocation10 + $0x490] sm:$0xff]
    %v255 = vld [vmem:[#allocation10 + $0x498] sm:$0xff]
    %v256 = vld [vmem:[#allocation10 + $0x4a0] sm:$0xff]
    %v257 = vld [vmem:[#allocation10 + $0x4a8] sm:$0xff]
    %v258 = vld [vmem:[#allocation10 + $0x4b0] sm:$0xff]
    %v259 = vld [vmem:[#allocation10 + $0x4b8] sm:$0xff]
    %v260 = vld [vmem:[#allocation10 + $0x4c0] sm:$0xff]
    %v261 = vld [vmem:[#allocation10 + $0x4c8] sm:$0xff]
    %v262 = vld [vmem:[#allocation10 + $0x4d0] sm:$0xff]
    %v263 = vld [vmem:[#allocation10 + $0x4d8] sm:$0xff]
    %v264 = vld [vmem:[#allocation10 + $0x4e0] sm:$0xff]
    %v265 = vld [vmem:[#allocation10 + $0x4e8] sm:$0xff]
    %v266 = vld [vmem:[#allocation10 + $0x4f0] sm:$0xff]
    %v267 = vld [vmem:[#allocation10 + $0x4f8] sm:$0xff]
    %v268 = vld [vmem:[#allocation10 + $0x500] sm:$0xff]
    %v269 = vld [vmem:[#allocation10 + $0x508] sm:$0xff]
    %v270 = vld [vmem:[#allocation10 + $0x510] sm:$0xff]
    %v271 = vld [vmem:[#allocation10 + $0x518] sm:$0xff]
    %v272 = vld [vmem:[#allocation10 + $0x520] sm:$0xff]
    %v273 = vld [vmem:[#allocation10 + $0x528] sm:$0xff]
    %v274 = vld [vmem:[#allocation10 + $0x530] sm:$0xff]
    %v275 = vld [vmem:[#allocation10 + $0x538] sm:$0xff]
    %v276 = vld [vmem:[#allocation10 + $0x540] sm:$0xff]
    %v277 = vld [vmem:[#allocation10 + $0x548] sm:$0xff]
    %v278 = vld [vmem:[#allocation10 + $0x550] sm:$0xff]
    %v279 = vld [vmem:[#allocation10 + $0x558] sm:$0xff]
    %v280 = vld [vmem:[#allocation10 + $0x560] sm:$0xff]
    %v281 = vld [vmem:[#allocation10 + $0x568] sm:$0xff]
    %v282 = vld [vmem:[#allocation10 + $0x570] sm:$0xff]
    %v283 = vld [vmem:[#allocation10 + $0x578] sm:$0xff]
    %v284 = vld [vmem:[#allocation10 + $0x580] sm:$0xff]
    %v285 = vld [vmem:[#allocation10 + $0x588] sm:$0xff]
    %v286 = vld [vmem:[#allocation10 + $0x590] sm:$0xff]
    %v287 = vld [vmem:[#allocation10 + $0x598] sm:$0xff]
    %v288 = vld [vmem:[#allocation10 + $0x5a0] sm:$0xff]
    %v289 = vld [vmem:[#allocation10 + $0x5a8] sm:$0xff]
    %v290 = vld [vmem:[#allocation10 + $0x5b0] sm:$0xff]
    %v291 = vld [vmem:[#allocation10 + $0x5b8] sm:$0xff]
    %v292 = vld [vmem:[#allocation10 + $0x5c0] sm:$0xff]
    %v293 = vld [vmem:[#allocation10 + $0x5c8] sm:$0xff]
    %v294 = vld [vmem:[#allocation10 + $0x5d0] sm:$0xff]
    %v295 = vld [vmem:[#allocation10 + $0x5d8] sm:$0xff]
    %v296 = vld [vmem:[#allocation10 + $0x5e0] sm:$0xff]
    %v297 = vld [vmem:[#allocation10 + $0x5e8] sm:$0xff]
    %v298 = vld [vmem:[#allocation10 + $0x5f0] sm:$0xff]
    %v299 = vld [vmem:[#allocation10 + $0x5f8] sm:$0xff]
    %300 = vmatprep.subr.mxu0 0.0
    %301 = vmatpush1.msra.mxu0 %v204
    %302 = vmatprep.subr.mxu0 0.0
    %303 = vmatpush1.msra.mxu0 %v205
    %304 = vmatprep.subr.mxu0 0.0
    %305 = vmatpush1.msra.mxu0 %v206
    %306 = vmatprep.subr.mxu0 0.0
    %307 = vmatpush1.msra.mxu0 %v207
    %308 = vmatprep.subr.mxu0 0.0
    %309 = vmatpush1.msra.mxu0 %v208
    %310 = vmatprep.subr.mxu0 0.0
    %311 = vmatpush1.msra.mxu0 %v209
    %312 = vmatprep.subr.mxu0 0.0
    %313 = vmatpush1.msra.mxu0 %v210
    %314 = vmatprep.subr.mxu0 0.0
    %315 = vmatpush1.msra.mxu0 %v211
    %316 = vmatprep.subr.mxu0 0.0
    %317 = vmatpush1.msra.mxu0 %v212
    %318 = vmatprep.subr.mxu0 0.0
    %319 = vmatpush1.msra.mxu0 %v213
    %320 = vmatprep.subr.mxu0 0.0
    %321 = vmatpush1.msra.mxu0 %v214
    %322 = vmatprep.subr.mxu0 0.0
    %323 = vmatpush1.msra.mxu0 %v215
    %324 = vmatprep.subr.mxu0 0.0
    %325 = vmatpush1.msra.mxu0 %v216
    %326 = vmatprep.subr.mxu0 0.0
    %327 = vmatpush1.msra.mxu0 %v217
    %328 = vmatprep.subr.mxu0 0.0
    %329 = vmatpush1.msra.mxu0 %v218
    %330 = vmatprep.subr.mxu0 0.0
    %331 = vmatpush1.msra.mxu0 %v219
    %332 = vmatprep.subr.mxu0 0.0
    %333 = vmatpush1.msra.mxu0 %v220
    %334 = vmatprep.subr.mxu0 0.0
    %335 = vmatpush1.msra.mxu0 %v221
    %336 = vmatprep.subr.mxu0 0.0
    %337 = vmatpush1.msra.mxu0 %v222
    %338 = vmatprep.subr.mxu0 0.0
    %339 = vmatpush1.msra.mxu0 %v223
    %340 = vmatprep.subr.mxu0 0.0
    %341 = vmatpush1.msra.mxu0 %v224
    %342 = vmatprep.subr.mxu0 0.0
    %343 = vmatpush1.msra.mxu0 %v225
    %344 = vmatprep.subr.mxu0 0.0
    %345 = vmatpush1.msra.mxu0 %v226
    %346 = vmatprep.subr.mxu0 0.0
    %347 = vmatpush1.msra.mxu0 %v227
    %348 = vmatprep.subr.mxu0 0.0
    %349 = vmatpush1.msra.mxu0 %v228
    %350 = vmatprep.subr.mxu0 0.0
    %351 = vmatpush1.msra.mxu0 %v229
    %352 = vmatprep.subr.mxu0 0.0
    %353 = vmatpush1.msra.mxu0 %v230
    %354 = vmatprep.subr.mxu0 0.0
    %355 = vmatpush1.msra.mxu0 %v231
    %356 = vmatprep.subr.mxu0 0.0
    %357 = vmatpush1.msra.mxu0 %v232
    %358 = vmatprep.subr.mxu0 0.0
    %359 = vmatpush1.msra.mxu0 %v233
    %360 = vmatprep.subr.mxu0 0.0
    %361 = vmatpush1.msra.mxu0 %v234
    %362 = vmatprep.subr.mxu0 0.0
    %363 = vmatpush1.msra.mxu0 %v235
    %364 = vmatprep.mubr.f32.mxu0 %v199
    %365 = vmatmul.mubr.f32.gmra.mrb[0].mxu0 %v198
    %v366 = vpop.f32.mrb[0].mxu0
    %v367 = vadd.f32 0.0, %v366
    %v368 = vpop.f32.mrb[0].mxu0
    %369 = vdwg.mxu0
    %370 = vmatprep.subr.mxu0 0.0
    %371 = vmatpush1.msra.mxu0 %v236
    %372 = vmatprep.subr.mxu0 0.0
    %373 = vmatpush1.msra.mxu0 %v237
    %374 = vmatprep.subr.mxu0 0.0
    %375 = vmatpush1.msra.mxu0 %v238
    %376 = vmatprep.subr.mxu0 0.0
    %377 = vmatpush1.msra.mxu0 %v239
    %378 = vmatprep.subr.mxu0 0.0
    %379 = vmatpush1.msra.mxu0 %v240
    %380 = vmatprep.subr.mxu0 0.0
    %381 = vmatpush1.msra.mxu0 %v241
    %382 = vmatprep.subr.mxu0 0.0
    %383 = vmatpush1.msra.mxu0 %v242
    %384 = vmatprep.subr.mxu0 0.0
    %385 = vmatpush1.msra.mxu0 %v243
    %386 = vmatprep.subr.mxu0 0.0
    %387 = vmatpush1.msra.mxu0 %v244
    %388 = vmatprep.subr.mxu0 0.0
    %389 = vmatpush1.msra.mxu0 %v245
    %390 = vmatprep.subr.mxu0 0.0
    %391 = vmatpush1.msra.mxu0 %v246
    %392 = vmatprep.subr.mxu0 0.0
    %393 = vmatpush1.msra.mxu0 %v247
    %394 = vmatprep.subr.mxu0 0.0
    %395 = vmatpush1.msra.mxu0 %v248
    %396 = vmatprep.subr.mxu0 0.0
    %397 = vmatpush1.msra.mxu0 %v249
    %398 = vmatprep.subr.mxu0 0.0
    %399 = vmatpush1.msra.mxu0 %v250
    %400 = vmatprep.subr.mxu0 0.0
    %401 = vmatpush1.msra.mxu0 %v251
    %402 = vmatprep.subr.mxu0 0.0
    %403 = vmatpush1.msra.mxu0 %v252
    %404 = vmatprep.subr.mxu0 0.0
    %405 = vmatpush1.msra.mxu0 %v253
    %406 = vmatprep.subr.mxu0 0.0
    %407 = vmatpush1.msra.mxu0 %v254
    %408 = vmatprep.subr.mxu0 0.0
    %409 = vmatpush1.msra.mxu0 %v255
    %410 = vmatprep.subr.mxu0 0.0
    %411 = vmatpush1.msra.mxu0 %v256
    %412 = vmatprep.subr.mxu0 0.0
    %413 = vmatpush1.msra.mxu0 %v257
    %414 = vmatprep.subr.mxu0 0.0
    %415 = vmatpush1.msra.mxu0 %v258
    %416 = vmatprep.subr.mxu0 0.0
    %417 = vmatpush1.msra.mxu0 %v259
    %418 = vmatprep.subr.mxu0 0.0
    %419 = vmatpush1.msra.mxu0 %v260
    %420 = vmatprep.subr.mxu0 0.0
    %421 = vmatpush1.msra.mxu0 %v261
    %422 = vmatprep.subr.mxu0 0.0
    %423 = vmatpush1.msra.mxu0 %v262
    %424 = vmatprep.subr.mxu0 0.0
    %425 = vmatpush1.msra.mxu0 %v263
    %426 = vmatprep.subr.mxu0 0.0
    %427 = vmatpush1.msra.mxu0 %v264
    %428 = vmatprep.subr.mxu0 0.0
    %429 = vmatpush1.msra.mxu0 %v265
    %430 = vmatprep.subr.mxu0 0.0
    %431 = vmatpush1.msra.mxu0 %v266
    %432 = vmatprep.subr.mxu0 0.0
    %433 = vmatpush1.msra.mxu0 %v267
    %434 = vmatprep.mubr.f32.mxu0 %v201
    %435 = vmatmul.mubr.f32.gmra.mrb[0].mxu0 %v200
    %v436 = vpop.f32.mrb[0].mxu0
    %v437 = vadd.f32 %v367, %v436
    %v438 = vpop.f32.mrb[0].mxu0
    %439 = vdwg.mxu0
    %440 = vmatprep.subr.mxu0 0.0
    %441 = vmatpush1.msra.mxu0 %v268
    %442 = vmatprep.subr.mxu0 0.0
    %443 = vmatpush1.msra.mxu0 %v269
    %444 = vmatprep.subr.mxu0 0.0
    %445 = vmatpush1.msra.mxu0 %v270
    %446 = vmatprep.subr.mxu0 0.0
    %447 = vmatpush1.msra.mxu0 %v271
    %448 = vmatprep.subr.mxu0 0.0
    %449 = vmatpush1.msra.mxu0 %v272
    %450 = vmatprep.subr.mxu0 0.0
    %451 = vmatpush1.msra.mxu0 %v273
    %452 = vmatprep.subr.mxu0 0.0
    %453 = vmatpush1.msra.mxu0 %v274
    %454 = vmatprep.subr.mxu0 0.0
    %455 = vmatpush1.msra.mxu0 %v275
    %456 = vmatprep.subr.mxu0 0.0
    %457 = vmatpush1.msra.mxu0 %v276
    %458 = vmatprep.subr.mxu0 0.0
    %459 = vmatpush1.msra.mxu0 %v277
    %460 = vmatprep.subr.mxu0 0.0
    %461 = vmatpush1.msra.mxu0 %v278
    %462 = vmatprep.subr.mxu0 0.0
    %463 = vmatpush1.msra.mxu0 %v279
    %464 = vmatprep.subr.mxu0 0.0
    %465 = vmatpush1.msra.mxu0 %v280
    %466 = vmatprep.subr.mxu0 0.0
    %467 = vmatpush1.msra.mxu0 %v281
    %468 = vmatprep.subr.mxu0 0.0
    %469 = vmatpush1.msra.mxu0 %v282
    %470 = vmatprep.subr.mxu0 0.0
    %471 = vmatpush1.msra.mxu0 %v283
    %472 = vmatprep.subr.mxu0 0.0
    %473 = vmatpush1.msra.mxu0 %v284
    %474 = vmatprep.subr.mxu0 0.0
    %475 = vmatpush1.msra.mxu0 %v285
    %476 = vmatprep.subr.mxu0 0.0
    %477 = vmatpush1.msra.mxu0 %v286
    %478 = vmatprep.subr.mxu0 0.0
    %479 = vmatpush1.msra.mxu0 %v287
    %480 = vmatprep.subr.mxu0 0.0
    %481 = vmatpush1.msra.mxu0 %v288
    %482 = vmatprep.subr.mxu0 0.0
    %483 = vmatpush1.msra.mxu0 %v289
    %484 = vmatprep.subr.mxu0 0.0
    %485 = vmatpush1.msra.mxu0 %v290
    %486 = vmatprep.subr.mxu0 0.0
    %487 = vmatpush1.msra.mxu0 %v291
    %488 = vmatprep.subr.mxu0 0.0
    %489 = vmatpush1.msra.mxu0 %v292
    %490 = vmatprep.subr.mxu0 0.0
    %491 = vmatpush1.msra.mxu0 %v293
    %492 = vmatprep.subr.mxu0 0.0
    %493 = vmatpush1.msra.mxu0 %v294
    %494 = vmatprep.subr.mxu0 0.0
    %495 = vmatpush1.msra.mxu0 %v295
    %496 = vmatprep.subr.mxu0 0.0
    %497 = vmatpush1.msra.mxu0 %v296
    %498 = vmatprep.subr.mxu0 0.0
    %499 = vmatpush1.msra.mxu0 %v297
    %500 = vmatprep.subr.mxu0 0.0
    %501 = vmatpush1.msra.mxu0 %v298
    %502 = vmatprep.subr.mxu0 0.0
    %503 = vmatpush1.msra.mxu0 %v299
    %504 = vmatprep.mubr.f32.mxu0 %v203
    %505 = vmatmul.mubr.f32.gmra.mrb[0].mxu0 %v202
    %v506 = vpop.f32.mrb[0].mxu0
    %v507 = vadd.f32 %v437, %v506
    %v508 = vpop.f32.mrb[0].mxu0
    %509 = vdwg.mxu0
    %510 = vmatprep.subr.mxu0 0.0
    %511 = vmatpush1.msra.mxu0 %v102
    %512 = vmatprep.subr.mxu0 0.0
    %513 = vmatpush1.msra.mxu0 %v103
    %514 = vmatprep.subr.mxu0 0.0
    %515 = vmatpush1.msra.mxu0 %v104
    %516 = vmatprep.subr.mxu0 0.0
    %517 = vmatpush1.msra.mxu0 %v105
    %518 = vmatprep.subr.mxu0 0.0
    %519 = vmatpush1.msra.mxu0 %v106
    %520 = vmatprep.subr.mxu0 0.0
    %521 = vmatpush1.msra.mxu0 %v107
    %522 = vmatprep.subr.mxu0 0.0
    %523 = vmatpush1.msra.mxu0 %v108
    %524 = vmatprep.subr.mxu0 0.0
    %525 = vmatpush1.msra.mxu0 %v109
    %526 = vmatprep.subr.mxu0 0.0
    %527 = vmatpush1.msra.mxu0 %v110
    %528 = vmatprep.subr.mxu0 0.0
    %529 = vmatpush1.msra.mxu0 %v111
    %530 = vmatprep.subr.mxu0 0.0
    %531 = vmatpush1.msra.mxu0 %v112
    %532 = vmatprep.subr.mxu0 0.0
    %533 = vmatpush1.msra.mxu0 %v113
    %534 = vmatprep.subr.mxu0 0.0
    %535 = vmatpush1.msra.mxu0 %v114
    %536 = vmatprep.subr.mxu0 0.0
    %537 = vmatpush1.msra.mxu0 %v115
    %538 = vmatprep.subr.mxu0 0.0
    %539 = vmatpush1.msra.mxu0 %v116
    %540 = vmatprep.subr.mxu0 0.0
    %541 = vmatpush1.msra.mxu0 %v117
    %542 = vmatprep.subr.mxu0 0.0
    %543 = vmatpush1.msra.mxu0 %v118
    %544 = vmatprep.subr.mxu0 0.0
    %545 = vmatpush1.msra.mxu0 %v119
    %546 = vmatprep.subr.mxu0 0.0
    %547 = vmatpush1.msra.mxu0 %v120
    %548 = vmatprep.subr.mxu0 0.0
    %549 = vmatpush1.msra.mxu0 %v121
    %550 = vmatprep.subr.mxu0 0.0
    %551 = vmatpush1.msra.mxu0 %v122
    %552 = vmatprep.subr.mxu0 0.0
    %553 = vmatpush1.msra.mxu0 %v123
    %554 = vmatprep.subr.mxu0 0.0
    %555 = vmatpush1.msra.mxu0 %v124
    %556 = vmatprep.subr.mxu0 0.0
    %557 = vmatpush1.msra.mxu0 %v125
    %558 = vmatprep.subr.mxu0 0.0
    %559 = vmatpush1.msra.mxu0 %v126
    %560 = vmatprep.subr.mxu0 0.0
    %561 = vmatpush1.msra.mxu0 %v127
    %562 = vmatprep.subr.mxu0 0.0
    %563 = vmatpush1.msra.mxu0 %v128
    %564 = vmatprep.subr.mxu0 0.0
    %565 = vmatpush1.msra.mxu0 %v129
    %566 = vmatprep.subr.mxu0 0.0
    %567 = vmatpush1.msra.mxu0 %v130
    %568 = vmatprep.subr.mxu0 0.0
    %569 = vmatpush1.msra.mxu0 %v131
    %570 = vmatprep.subr.mxu0 0.0
    %571 = vmatpush1.msra.mxu0 %v132
    %572 = vmatprep.subr.mxu0 0.0
    %573 = vmatpush1.msra.mxu0 %v133
    %574 = vmatprep.mubr.f32.mxu0 %v97
    %575 = vmatmul.mubr.f32.gmra.mrb[0].mxu0 %v96
    %v576 = vpop.f32.mrb[0].mxu0
    %v577 = vadd.f32 %v507, %v576
    %v578 = vpop.f32.mrb[0].mxu0
    %579 = vdwg.mxu0
    %580 = vmatprep.subr.mxu0 0.0
    %581 = vmatpush1.msra.mxu0 %v134
    %582 = vmatprep.subr.mxu0 0.0
    %583 = vmatpush1.msra.mxu0 %v135
    %584 = vmatprep.subr.mxu0 0.0
    %585 = vmatpush1.msra.mxu0 %v136
    %586 = vmatprep.subr.mxu0 0.0
    %587 = vmatpush1.msra.mxu0 %v137
    %588 = vmatprep.subr.mxu0 0.0
    %589 = vmatpush1.msra.mxu0 %v138
    %590 = vmatprep.subr.mxu0 0.0
    %591 = vmatpush1.msra.mxu0 %v139
    %592 = vmatprep.subr.mxu0 0.0
    %593 = vmatpush1.msra.mxu0 %v140
    %594 = vmatprep.subr.mxu0 0.0
    %595 = vmatpush1.msra.mxu0 %v141
    %596 = vmatprep.subr.mxu0 0.0
    %597 = vmatpush1.msra.mxu0 %v142
    %598 = vmatprep.subr.mxu0 0.0
    %599 = vmatpush1.msra.mxu0 %v143
    %600 = vmatprep.subr.mxu0 0.0
    %601 = vmatpush1.msra.mxu0 %v144
    %602 = vmatprep.subr.mxu0 0.0
    %603 = vmatpush1.msra.mxu0 %v145
    %604 = vmatprep.subr.mxu0 0.0
    %605 = vmatpush1.msra.mxu0 %v146
    %606 = vmatprep.subr.mxu0 0.0
    %607 = vmatpush1.msra.mxu0 %v147
    %608 = vmatprep.subr.mxu0 0.0
    %609 = vmatpush1.msra.mxu0 %v148
    %610 = vmatprep.subr.mxu0 0.0
    %611 = vmatpush1.msra.mxu0 %v149
    %612 = vmatprep.subr.mxu0 0.0
    %613 = vmatpush1.msra.mxu0 %v150
    %614 = vmatprep.subr.mxu0 0.0
    %615 = vmatpush1.msra.mxu0 %v151
    %616 = vmatprep.subr.mxu0 0.0
    %617 = vmatpush1.msra.mxu0 %v152
    %618 = vmatprep.subr.mxu0 0.0
    %619 = vmatpush1.msra.mxu0 %v153
    %620 = vmatprep.subr.mxu0 0.0
    %621 = vmatpush1.msra.mxu0 %v154
    %622 = vmatprep.subr.mxu0 0.0
    %623 = vmatpush1.msra.mxu0 %v155
    %624 = vmatprep.subr.mxu0 0.0
    %625 = vmatpush1.msra.mxu0 %v156
    %626 = vmatprep.subr.mxu0 0.0
    %627 = vmatpush1.msra.mxu0 %v157
    %628 = vmatprep.subr.mxu0 0.0
    %629 = vmatpush1.msra.mxu0 %v158
    %630 = vmatprep.subr.mxu0 0.0
    %631 = vmatpush1.msra.mxu0 %v159
    %632 = vmatprep.subr.mxu0 0.0
    %633 = vmatpush1.msra.mxu0 %v160
    %634 = vmatprep.subr.mxu0 0.0
    %635 = vmatpush1.msra.mxu0 %v161
    %636 = vmatprep.subr.mxu0 0.0
    %637 = vmatpush1.msra.mxu0 %v162
    %638 = vmatprep.subr.mxu0 0.0
    %639 = vmatpush1.msra.mxu0 %v163
    %640 = vmatprep.subr.mxu0 0.0
    %641 = vmatpush1.msra.mxu0 %v164
    %642 = vmatprep.subr.mxu0 0.0
    %643 = vmatpush1.msra.mxu0 %v165
    %644 = vmatprep.mubr.f32.mxu0 %v99
    %645 = vmatmul.mubr.f32.gmra.mrb[0].mxu0 %v98
    %v646 = vpop.f32.mrb[0].mxu0
    %v647 = vadd.f32 %v577, %v646
    %v648 = vpop.f32.mrb[0].mxu0
    %649 = vdwg.mxu0
    %650 = vmatprep.subr.mxu0 0.0
    %651 = vmatpush1.msra.mxu0 %v166
    %652 = vmatprep.subr.mxu0 0.0
    %653 = vmatpush1.msra.mxu0 %v167
    %654 = vmatprep.subr.mxu0 0.0
    %655 = vmatpush1.msra.mxu0 %v168
    %656 = vmatprep.subr.mxu0 0.0
    %657 = vmatpush1.msra.mxu0 %v169
    %658 = vmatprep.subr.mxu0 0.0
    %659 = vmatpush1.msra.mxu0 %v170
    %660 = vmatprep.subr.mxu0 0.0
    %661 = vmatpush1.msra.mxu0 %v171
    %662 = vmatprep.subr.mxu0 0.0
    %663 = vmatpush1.msra.mxu0 %v172
    %664 = vmatprep.subr.mxu0 0.0
    %665 = vmatpush1.msra.mxu0 %v173
    %666 = vmatprep.subr.mxu0 0.0
    %667 = vmatpush1.msra.mxu0 %v174
    %668 = vmatprep.subr.mxu0 0.0
    %669 = vmatpush1.msra.mxu0 %v175
    %670 = vmatprep.subr.mxu0 0.0
    %671 = vmatpush1.msra.mxu0 %v176
    %672 = vmatprep.subr.mxu0 0.0
    %673 = vmatpush1.msra.mxu0 %v177
    %674 = vmatprep.subr.mxu0 0.0
    %675 = vmatpush1.msra.mxu0 %v178
    %676 = vmatprep.subr.mxu0 0.0
    %677 = vmatpush1.msra.mxu0 %v179
    %678 = vmatprep.subr.mxu0 0.0
    %679 = vmatpush1.msra.mxu0 %v180
    %680 = vmatprep.subr.mxu0 0.0
    %681 = vmatpush1.msra.mxu0 %v181
    %682 = vmatprep.subr.mxu0 0.0
    %683 = vmatpush1.msra.mxu0 %v182
    %684 = vmatprep.subr.mxu0 0.0
    %685 = vmatpush1.msra.mxu0 %v183
    %686 = vmatprep.subr.mxu0 0.0
    %687 = vmatpush1.msra.mxu0 %v184
    %688 = vmatprep.subr.mxu0 0.0
    %689 = vmatpush1.msra.mxu0 %v185
    %690 = vmatprep.subr.mxu0 0.0
    %691 = vmatpush1.msra.mxu0 %v186
    %692 = vmatprep.subr.mxu0 0.0
    %693 = vmatpush1.msra.mxu0 %v187
    %694 = vmatprep.subr.mxu0 0.0
    %695 = vmatpush1.msra.mxu0 %v188
    %696 = vmatprep.subr.mxu0 0.0
    %697 = vmatpush1.msra.mxu0 %v189
    %698 = vmatprep.subr.mxu0 0.0
    %699 = vmatpush1.msra.mxu0 %v190
    %700 = vmatprep.subr.mxu0 0.0
    %701 = vmatpush1.msra.mxu0 %v191
    %702 = vmatprep.subr.mxu0 0.0
    %703 = vmatpush1.msra.mxu0 %v192
    %704 = vmatprep.subr.mxu0 0.0
    %705 = vmatpush1.msra.mxu0 %v193
    %706 = vmatprep.subr.mxu0 0.0
    %707 = vmatpush1.msra.mxu0 %v194
    %708 = vmatprep.subr.mxu0 0.0
    %709 = vmatpush1.msra.mxu0 %v195
    %710 = vmatprep.subr.mxu0 0.0
    %711 = vmatpush1.msra.mxu0 %v196
    %712 = vmatprep.subr.mxu0 0.0
    %713 = vmatpush1.msra.mxu0 %v197
    %714 = vmatprep.mubr.f32.mxu0 %v101
    %715 = vmatmul.mubr.f32.gmra.mrb[0].mxu0 %v100
    %v716 = vpop.f32.mrb[0].mxu0
    %v717 = vadd.f32 %v647, %v716
    %v718 = vpop.f32.mrb[0].mxu0
    %719 = vdwg.mxu0
    %v720 = vld [vmem:[#allocation7] sm:$0xff]
    %v721 = vld [vmem:[#allocation7 + $0x8] sm:$0xff]
    %v722 = vld [vmem:[#allocation7 + $0x10] sm:$0xff]
    %v723 = vld [vmem:[#allocation7 + $0x18] sm:$0xff]
    %v724 = vld [vmem:[#allocation7 + $0x20] sm:$0xff]
    %v725 = vld [vmem:[#allocation7 + $0x28] sm:$0xff]
    %v726 = vld [vmem:[#allocation10 + $0x600] sm:$0xff]
    %v727 = vld [vmem:[#allocation10 + $0x608] sm:$0xff]
    %v728 = vld [vmem:[#allocation10 + $0x610] sm:$0xff]
    %v729 = vld [vmem:[#allocation10 + $0x618] sm:$0xff]
    %v730 = vld [vmem:[#allocation10 + $0x620] sm:$0xff]
    %v731 = vld [vmem:[#allocation10 + $0x628] sm:$0xff]
    %v732 = vld [vmem:[#allocation10 + $0x630] sm:$0xff]
    %v733 = vld [vmem:[#allocation10 + $0x638] sm:$0xff]
    %v734 = vld [vmem:[#allocation10 + $0x640] sm:$0xff]
    %v735 = vld [vmem:[#allocation10 + $0x648] sm:$0xff]
    %v736 = vld [vmem:[#allocation10 + $0x650] sm:$0xff]
    %v737 = vld [vmem:[#allocation10 + $0x658] sm:$0xff]
    %v738 = vld [vmem:[#allocation10 + $0x660] sm:$0xff]
    %v739 = vld [vmem:[#allocation10 + $0x668] sm:$0xff]
    %v740 = vld [vmem:[#allocation10 + $0x670] sm:$0xff]
    %v741 = vld [vmem:[#allocation10 + $0x678] sm:$0xff]
    %v742 = vld [vmem:[#allocation10 + $0x680] sm:$0xff]
    %v743 = vld [vmem:[#allocation10 + $0x688] sm:$0xff]
    %v744 = vld [vmem:[#allocation10 + $0x690] sm:$0xff]
    %v745 = vld [vmem:[#allocation10 + $0x698] sm:$0xff]
    %v746 = vld [vmem:[#allocation10 + $0x6a0] sm:$0xff]
    %v747 = vld [vmem:[#allocation10 + $0x6a8] sm:$0xff]
    %v748 = vld [vmem:[#allocation10 + $0x6b0] sm:$0xff]
    %v749 = vld [vmem:[#allocation10 + $0x6b8] sm:$0xff]
    %v750 = vld [vmem:[#allocation10 + $0x6c0] sm:$0xff]
    %v751 = vld [vmem:[#allocation10 + $0x6c8] sm:$0xff]
    %v752 = vld [vmem:[#allocation10 + $0x6d0] sm:$0xff]
    %v753 = vld [vmem:[#allocation10 + $0x6d8] sm:$0xff]
    %v754 = vld [vmem:[#allocation10 + $0x6e0] sm:$0xff]
    %v755 = vld [vmem:[#allocation10 + $0x6e8] sm:$0xff]
    %v756 = vld [vmem:[#allocation10 + $0x6f0] sm:$0xff]
    %v757 = vld [vmem:[#allocation10 + $0x6f8] sm:$0xff]
    %v758 = vld [vmem:[#allocation10 + $0x700] sm:$0xff]
    %v759 = vld [vmem:[#allocation10 + $0x708] sm:$0xff]
    %v760 = vld [vmem:[#allocation10 + $0x710] sm:$0xff]
    %v761 = vld [vmem:[#allocation10 + $0x718] sm:$0xff]
    %v762 = vld [vmem:[#allocation10 + $0x720] sm:$0xff]
    %v763 = vld [vmem:[#allocation10 + $0x728] sm:$0xff]
    %v764 = vld [vmem:[#allocation10 + $0x730] sm:$0xff]
    %v765 = vld [vmem:[#allocation10 + $0x738] sm:$0xff]
    %v766 = vld [vmem:[#allocation10 + $0x740] sm:$0xff]
    %v767 = vld [vmem:[#allocation10 + $0x748] sm:$0xff]
    %v768 = vld [vmem:[#allocation10 + $0x750] sm:$0xff]
    %v769 = vld [vmem:[#allocation10 + $0x758] sm:$0xff]
    %v770 = vld [vmem:[#allocation10 + $0x760] sm:$0xff]
    %v771 = vld [vmem:[#allocation10 + $0x768] sm:$0xff]
    %v772 = vld [vmem:[#allocation10 + $0x770] sm:$0xff]
    %v773 = vld [vmem:[#allocation10 + $0x778] sm:$0xff]
    %v774 = vld [vmem:[#allocation10 + $0x780] sm:$0xff]
    %v775 = vld [vmem:[#allocation10 + $0x788] sm:$0xff]
    %v776 = vld [vmem:[#allocation10 + $0x790] sm:$0xff]
    %v777 = vld [vmem:[#allocation10 + $0x798] sm:$0xff]
    %v778 = vld [vmem:[#allocation10 + $0x7a0] sm:$0xff]
    %v779 = vld [vmem:[#allocation10 + $0x7a8] sm:$0xff]
    %v780 = vld [vmem:[#allocation10 + $0x7b0] sm:$0xff]
    %v781 = vld [vmem:[#allocation10 + $0x7b8] sm:$0xff]
    %v782 = vld [vmem:[#allocation10 + $0x7c0] sm:$0xff]
    %v783 = vld [vmem:[#allocation10 + $0x7c8] sm:$0xff]
    %v784 = vld [vmem:[#allocation10 + $0x7d0] sm:$0xff]
    %v785 = vld [vmem:[#allocation10 + $0x7d8] sm:$0xff]
    %v786 = vld [vmem:[#allocation10 + $0x7e0] sm:$0xff]
    %v787 = vld [vmem:[#allocation10 + $0x7e8] sm:$0xff]
    %v788 = vld [vmem:[#allocation10 + $0x7f0] sm:$0xff]
    %v789 = vld [vmem:[#allocation10 + $0x7f8] sm:$0xff]
    %v790 = vld [vmem:[#allocation10 + $0x800] sm:$0xff]
    %v791 = vld [vmem:[#allocation10 + $0x808] sm:$0xff]
    %v792 = vld [vmem:[#allocation10 + $0x810] sm:$0xff]
    %v793 = vld [vmem:[#allocation10 + $0x818] sm:$0xff]
    %v794 = vld [vmem:[#allocation10 + $0x820] sm:$0xff]
    %v795 = vld [vmem:[#allocation10 + $0x828] sm:$0xff]
    %v796 = vld [vmem:[#allocation10 + $0x830] sm:$0xff]
    %v797 = vld [vmem:[#allocation10 + $0x838] sm:$0xff]
    %v798 = vld [vmem:[#allocation10 + $0x840] sm:$0xff]
    %v799 = vld [vmem:[#allocation10 + $0x848] sm:$0xff]
    %v800 = vld [vmem:[#allocation10 + $0x850] sm:$0xff]
    %v801 = vld [vmem:[#allocation10 + $0x858] sm:$0xff]
    %v802 = vld [vmem:[#allocation10 + $0x860] sm:$0xff]
    %v803 = vld [vmem:[#allocation10 + $0x868] sm:$0xff]
    %v804 = vld [vmem:[#allocation10 + $0x870] sm:$0xff]
    %v805 = vld [vmem:[#allocation10 + $0x878] sm:$0xff]
    %v806 = vld [vmem:[#allocation10 + $0x880] sm:$0xff]
    %v807 = vld [vmem:[#allocation10 + $0x888] sm:$0xff]
    %v808 = vld [vmem:[#allocation10 + $0x890] sm:$0xff]
    %v809 = vld [vmem:[#allocation10 + $0x898] sm:$0xff]
    %v810 = vld [vmem:[#allocation10 + $0x8a0] sm:$0xff]
    %v811 = vld [vmem:[#allocation10 + $0x8a8] sm:$0xff]
    %v812 = vld [vmem:[#allocation10 + $0x8b0] sm:$0xff]
    %v813 = vld [vmem:[#allocation10 + $0x8b8] sm:$0xff]
    %v814 = vld [vmem:[#allocation10 + $0x8c0] sm:$0xff]
    %v815 = vld [vmem:[#allocation10 + $0x8c8] sm:$0xff]
    %v816 = vld [vmem:[#allocation10 + $0x8d0] sm:$0xff]
    %v817 = vld [vmem:[#allocation10 + $0x8d8] sm:$0xff]
    %v818 = vld [vmem:[#allocation10 + $0x8e0] sm:$0xff]
    %v819 = vld [vmem:[#allocation10 + $0x8e8] sm:$0xff]
    %v820 = vld [vmem:[#allocation10 + $0x8f0] sm:$0xff]
    %v821 = vld [vmem:[#allocation10 + $0x8f8] sm:$0xff]
    %822 = vmatprep.subr.mxu0 0.0
    %823 = vmatpush1.msra.mxu0 %v726
    %824 = vmatprep.subr.mxu0 0.0
    %825 = vmatpush1.msra.mxu0 %v727
    %826 = vmatprep.subr.mxu0 0.0
    %827 = vmatpush1.msra.mxu0 %v728
    %828 = vmatprep.subr.mxu0 0.0
    %829 = vmatpush1.msra.mxu0 %v729
    %830 = vmatprep.subr.mxu0 0.0
    %831 = vmatpush1.msra.mxu0 %v730
    %832 = vmatprep.subr.mxu0 0.0
    %833 = vmatpush1.msra.mxu0 %v731
    %834 = vmatprep.subr.mxu0 0.0
    %835 = vmatpush1.msra.mxu0 %v732
    %836 = vmatprep.subr.mxu0 0.0
    %837 = vmatpush1.msra.mxu0 %v733
    %838 = vmatprep.subr.mxu0 0.0
    %839 = vmatpush1.msra.mxu0 %v734
    %840 = vmatprep.subr.mxu0 0.0
    %841 = vmatpush1.msra.mxu0 %v735
    %842 = vmatprep.subr.mxu0 0.0
    %843 = vmatpush1.msra.mxu0 %v736
    %844 = vmatprep.subr.mxu0 0.0
    %845 = vmatpush1.msra.mxu0 %v737
    %846 = vmatprep.subr.mxu0 0.0
    %847 = vmatpush1.msra.mxu0 %v738
    %848 = vmatprep.subr.mxu0 0.0
    %849 = vmatpush1.msra.mxu0 %v739
    %850 = vmatprep.subr.mxu0 0.0
    %851 = vmatpush1.msra.mxu0 %v740
    %852 = vmatprep.subr.mxu0 0.0
    %853 = vmatpush1.msra.mxu0 %v741
    %854 = vmatprep.subr.mxu0 0.0
    %855 = vmatpush1.msra.mxu0 %v742
    %856 = vmatprep.subr.mxu0 0.0
    %857 = vmatpush1.msra.mxu0 %v743
    %858 = vmatprep.subr.mxu0 0.0
    %859 = vmatpush1.msra.mxu0 %v744
    %860 = vmatprep.subr.mxu0 0.0
    %861 = vmatpush1.msra.mxu0 %v745
    %862 = vmatprep.subr.mxu0 0.0
    %863 = vmatpush1.msra.mxu0 %v746
    %864 = vmatprep.subr.mxu0 0.0
    %865 = vmatpush1.msra.mxu0 %v747
    %866 = vmatprep.subr.mxu0 0.0
    %867 = vmatpush1.msra.mxu0 %v748
    %868 = vmatprep.subr.mxu0 0.0
    %869 = vmatpush1.msra.mxu0 %v749
    %870 = vmatprep.subr.mxu0 0.0
    %871 = vmatpush1.msra.mxu0 %v750
    %872 = vmatprep.subr.mxu0 0.0
    %873 = vmatpush1.msra.mxu0 %v751
    %874 = vmatprep.subr.mxu0 0.0
    %875 = vmatpush1.msra.mxu0 %v752
    %876 = vmatprep.subr.mxu0 0.0
    %877 = vmatpush1.msra.mxu0 %v753
    %878 = vmatprep.subr.mxu0 0.0
    %879 = vmatpush1.msra.mxu0 %v754
    %880 = vmatprep.subr.mxu0 0.0
    %881 = vmatpush1.msra.mxu0 %v755
    %882 = vmatprep.subr.mxu0 0.0
    %883 = vmatpush1.msra.mxu0 %v756
    %884 = vmatprep.subr.mxu0 0.0
    %885 = vmatpush1.msra.mxu0 %v757
    %886 = vmatprep.mubr.f32.mxu0 %v721
    %887 = vmatmul.mubr.f32.gmra.mrb[0].mxu0 %v720
    %v888 = vpop.f32.mrb[0].mxu0
    %v889 = vadd.f32 0.0, %v888
    %v890 = vpop.f32.mrb[0].mxu0
    %891 = vdwg.mxu0
    %892 = vmatprep.subr.mxu0 0.0
    %893 = vmatpush1.msra.mxu0 %v758
    %894 = vmatprep.subr.mxu0 0.0
    %895 = vmatpush1.msra.mxu0 %v759
    %896 = vmatprep.subr.mxu0 0.0
    %897 = vmatpush1.msra.mxu0 %v760
    %898 = vmatprep.subr.mxu0 0.0
    %899 = vmatpush1.msra.mxu0 %v761
    %900 = vmatprep.subr.mxu0 0.0
    %901 = vmatpush1.msra.mxu0 %v762
    %902 = vmatprep.subr.mxu0 0.0
    %903 = vmatpush1.msra.mxu0 %v763
    %904 = vmatprep.subr.mxu0 0.0
    %905 = vmatpush1.msra.mxu0 %v764
    %906 = vmatprep.subr.mxu0 0.0
    %907 = vmatpush1.msra.mxu0 %v765
    %908 = vmatprep.subr.mxu0 0.0
    %909 = vmatpush1.msra.mxu0 %v766
    %910 = vmatprep.subr.mxu0 0.0
    %911 = vmatpush1.msra.mxu0 %v767
    %912 = vmatprep.subr.mxu0 0.0
    %913 = vmatpush1.msra.mxu0 %v768
    %914 = vmatprep.subr.mxu0 0.0
    %915 = vmatpush1.msra.mxu0 %v769
    %916 = vmatprep.subr.mxu0 0.0
    %917 = vmatpush1.msra.mxu0 %v770
    %918 = vmatprep.subr.mxu0 0.0
    %919 = vmatpush1.msra.mxu0 %v771
    %920 = vmatprep.subr.mxu0 0.0
    %921 = vmatpush1.msra.mxu0 %v772
    %922 = vmatprep.subr.mxu0 0.0
    %923 = vmatpush1.msra.mxu0 %v773
    %924 = vmatprep.subr.mxu0 0.0
    %925 = vmatpush1.msra.mxu0 %v774
    %926 = vmatprep.subr.mxu0 0.0
    %927 = vmatpush1.msra.mxu0 %v775
    %928 = vmatprep.subr.mxu0 0.0
    %929 = vmatpush1.msra.mxu0 %v776
    %930 = vmatprep.subr.mxu0 0.0
    %931 = vmatpush1.msra.mxu0 %v777
    %932 = vmatprep.subr.mxu0 0.0
    %933 = vmatpush1.msra.mxu0 %v778
    %934 = vmatprep.subr.mxu0 0.0
    %935 = vmatpush1.msra.mxu0 %v779
    %936 = vmatprep.subr.mxu0 0.0
    %937 = vmatpush1.msra.mxu0 %v780
    %938 = vmatprep.subr.mxu0 0.0
    %939 = vmatpush1.msra.mxu0 %v781
    %940 = vmatprep.subr.mxu0 0.0
    %941 = vmatpush1.msra.mxu0 %v782
    %942 = vmatprep.subr.mxu0 0.0
    %943 = vmatpush1.msra.mxu0 %v783
    %944 = vmatprep.subr.mxu0 0.0
    %945 = vmatpush1.msra.mxu0 %v784
    %946 = vmatprep.subr.mxu0 0.0
    %947 = vmatpush1.msra.mxu0 %v785
    %948 = vmatprep.subr.mxu0 0.0
    %949 = vmatpush1.msra.mxu0 %v786
    %950 = vmatprep.subr.mxu0 0.0
    %951 = vmatpush1.msra.mxu0 %v787
    %952 = vmatprep.subr.mxu0 0.0
    %953 = vmatpush1.msra.mxu0 %v788
    %954 = vmatprep.subr.mxu0 0.0
    %955 = vmatpush1.msra.mxu0 %v789
    %956 = vmatprep.mubr.f32.mxu0 %v723
    %957 = vmatmul.mubr.f32.gmra.mrb[0].mxu0 %v722
    %v958 = vpop.f32.mrb[0].mxu0
    %v959 = vadd.f32 %v889, %v958
    %v960 = vpop.f32.mrb[0].mxu0
    %961 = vdwg.mxu0
    %962 = vmatprep.subr.mxu0 0.0
    %963 = vmatpush1.msra.mxu0 %v790
    %964 = vmatprep.subr.mxu0 0.0
    %965 = vmatpush1.msra.mxu0 %v791
    %966 = vmatprep.subr.mxu0 0.0
    %967 = vmatpush1.msra.mxu0 %v792
    %968 = vmatprep.subr.mxu0 0.0
    %969 = vmatpush1.msra.mxu0 %v793
    %970 = vmatprep.subr.mxu0 0.0
    %971 = vmatpush1.msra.mxu0 %v794
    %972 = vmatprep.subr.mxu0 0.0
    %973 = vmatpush1.msra.mxu0 %v795
    %974 = vmatprep.subr.mxu0 0.0
    %975 = vmatpush1.msra.mxu0 %v796
    %976 = vmatprep.subr.mxu0 0.0
    %977 = vmatpush1.msra.mxu0 %v797
    %978 = vmatprep.subr.mxu0 0.0
    %979 = vmatpush1.msra.mxu0 %v798
    %980 = vmatprep.subr.mxu0 0.0
    %981 = vmatpush1.msra.mxu0 %v799
    %982 = vmatprep.subr.mxu0 0.0
    %983 = vmatpush1.msra.mxu0 %v800
    %984 = vmatprep.subr.mxu0 0.0
    %985 = vmatpush1.msra.mxu0 %v801
    %986 = vmatprep.subr.mxu0 0.0
    %987 = vmatpush1.msra.mxu0 %v802
    %988 = vmatprep.subr.mxu0 0.0
    %989 = vmatpush1.msra.mxu0 %v803
    %990 = vmatprep.subr.mxu0 0.0
    %991 = vmatpush1.msra.mxu0 %v804
    %992 = vmatprep.subr.mxu0 0.0
    %993 = vmatpush1.msra.mxu0 %v805
    %994 = vmatprep.subr.mxu0 0.0
    %995 = vmatpush1.msra.mxu0 %v806
    %996 = vmatprep.subr.mxu0 0.0
    %997 = vmatpush1.msra.mxu0 %v807
    %998 = vmatprep.subr.mxu0 0.0
    %999 = vmatpush1.msra.mxu0 %v808
    %1000 = vmatprep.subr.mxu0 0.0
    %1001 = vmatpush1.msra.mxu0 %v809
    %1002 = vmatprep.subr.mxu0 0.0
    %1003 = vmatpush1.msra.mxu0 %v810
    %1004 = vmatprep.subr.mxu0 0.0
    %1005 = vmatpush1.msra.mxu0 %v811
    %1006 = vmatprep.subr.mxu0 0.0
    %1007 = vmatpush1.msra.mxu0 %v812
    %1008 = vmatprep.subr.mxu0 0.0
    %1009 = vmatpush1.msra.mxu0 %v813
    %1010 = vmatprep.subr.mxu0 0.0
    %1011 = vmatpush1.msra.mxu0 %v814
    %1012 = vmatprep.subr.mxu0 0.0
    %1013 = vmatpush1.msra.mxu0 %v815
    %1014 = vmatprep.subr.mxu0 0.0
    %1015 = vmatpush1.msra.mxu0 %v816
    %1016 = vmatprep.subr.mxu0 0.0
    %1017 = vmatpush1.msra.mxu0 %v817
    %1018 = vmatprep.subr.mxu0 0.0
    %1019 = vmatpush1.msra.mxu0 %v818
    %1020 = vmatprep.subr.mxu0 0.0
    %1021 = vmatpush1.msra.mxu0 %v819
    %1022 = vmatprep.subr.mxu0 0.0
    %1023 = vmatpush1.msra.mxu0 %v820
    %1024 = vmatprep.subr.mxu0 0.0
    %1025 = vmatpush1.msra.mxu0 %v821
    %1026 = vmatprep.mubr.f32.mxu0 %v725
    %1027 = vmatmul.mubr.f32.gmra.mrb[0].mxu0 %v724
    %v1028 = vpop.f32.mrb[0].mxu0
    %v1029 = vadd.f32 %v959, %v1028
    %v1030 = vpop.f32.mrb[0].mxu0
    %1031 = vdwg.mxu0
    %v1032 = vadd.f32 %v717, %v1029
    %v1033 = vld [vmem:[#allocation8] sm:$0xff]
    %v1034 = vld [vmem:[#allocation8 + $0x8] sm:$0xff]
    %v1035 = vld [vmem:[#allocation8 + $0x10] sm:$0xff]
    %v1036 = vld [vmem:[#allocation8 + $0x18] sm:$0xff]
    %v1037 = vld [vmem:[#allocation8 + $0x20] sm:$0xff]
    %v1038 = vld [vmem:[#allocation8 + $0x28] sm:$0xff]
    %v1039 = vld [vmem:[#allocation10 + $0x900] sm:$0xff]
    %v1040 = vld [vmem:[#allocation10 + $0x908] sm:$0xff]
    %v1041 = vld [vmem:[#allocation10 + $0x910] sm:$0xff]
    %v1042 = vld [vmem:[#allocation10 + $0x918] sm:$0xff]
    %v1043 = vld [vmem:[#allocation10 + $0x920] sm:$0xff]
    %v1044 = vld [vmem:[#allocation10 + $0x928] sm:$0xff]
    %v1045 = vld [vmem:[#allocation10 + $0x930] sm:$0xff]
    %v1046 = vld [vmem:[#allocation10 + $0x938] sm:$0xff]
    %v1047 = vld [vmem:[#allocation10 + $0x940] sm:$0xff]
    %v1048 = vld [vmem:[#allocation10 + $0x948] sm:$0xff]
    %v1049 = vld [vmem:[#allocation10 + $0x950] sm:$0xff]
    %v1050 = vld [vmem:[#allocation10 + $0x958] sm:$0xff]
    %v1051 = vld [vmem:[#allocation10 + $0x960] sm:$0xff]
    %v1052 = vld [vmem:[#allocation10 + $0x968] sm:$0xff]
    %v1053 = vld [vmem:[#allocation10 + $0x970] sm:$0xff]
    %v1054 = vld [vmem:[#allocation10 + $0x978] sm:$0xff]
    %v1055 = vld [vmem:[#allocation10 + $0x980] sm:$0xff]
    %v1056 = vld [vmem:[#allocation10 + $0x988] sm:$0xff]
    %v1057 = vld [vmem:[#allocation10 + $0x990] sm:$0xff]
    %v1058 = vld [vmem:[#allocation10 + $0x998] sm:$0xff]
    %v1059 = vld [vmem:[#allocation10 + $0x9a0] sm:$0xff]
    %v1060 = vld [vmem:[#allocation10 + $0x9a8] sm:$0xff]
    %v1061 = vld [vmem:[#allocation10 + $0x9b0] sm:$0xff]
    %v1062 = vld [vmem:[#allocation10 + $0x9b8] sm:$0xff]
    %v1063 = vld [vmem:[#allocation10 + $0x9c0] sm:$0xff]
    %v1064 = vld [vmem:[#allocation10 + $0x9c8] sm:$0xff]
    %v1065 = vld [vmem:[#allocation10 + $0x9d0] sm:$0xff]
    %v1066 = vld [vmem:[#allocation10 + $0x9d8] sm:$0xff]
    %v1067 = vld [vmem:[#allocation10 + $0x9e0] sm:$0xff]
    %v1068 = vld [vmem:[#allocation10 + $0x9e8] sm:$0xff]
    %v1069 = vld [vmem:[#allocation10 + $0x9f0] sm:$0xff]
    %v1070 = vld [vmem:[#allocation10 + $0x9f8] sm:$0xff]
    %v1071 = vld [vmem:[#allocation10 + $0xa00] sm:$0xff]
    %v1072 = vld [vmem:[#allocation10 + $0xa08] sm:$0xff]
    %v1073 = vld [vmem:[#allocation10 + $0xa10] sm:$0xff]
    %v1074 = vld [vmem:[#allocation10 + $0xa18] sm:$0xff]
    %v1075 = vld [vmem:[#allocation10 + $0xa20] sm:$0xff]
    %v1076 = vld [vmem:[#allocation10 + $0xa28] sm:$0xff]
    %v1077 = vld [vmem:[#allocation10 + $0xa30] sm:$0xff]
    %v1078 = vld [vmem:[#allocation10 + $0xa38] sm:$0xff]
    %v1079 = vld [vmem:[#allocation10 + $0xa40] sm:$0xff]
    %v1080 = vld [vmem:[#allocation10 + $0xa48] sm:$0xff]
    %v1081 = vld [vmem:[#allocation10 + $0xa50] sm:$0xff]
    %v1082 = vld [vmem:[#allocation10 + $0xa58] sm:$0xff]
    %v1083 = vld [vmem:[#allocation10 + $0xa60] sm:$0xff]
    %v1084 = vld [vmem:[#allocation10 + $0xa68] sm:$0xff]
    %v1085 = vld [vmem:[#allocation10 + $0xa70] sm:$0xff]
    %v1086 = vld [vmem:[#allocation10 + $0xa78] sm:$0xff]
    %v1087 = vld [vmem:[#allocation10 + $0xa80] sm:$0xff]
    %v1088 = vld [vmem:[#allocation10 + $0xa88] sm:$0xff]
    %v1089 = vld [vmem:[#allocation10 + $0xa90] sm:$0xff]
    %v1090 = vld [vmem:[#allocation10 + $0xa98] sm:$0xff]
    %v1091 = vld [vmem:[#allocation10 + $0xaa0] sm:$0xff]
    %v1092 = vld [vmem:[#allocation10 + $0xaa8] sm:$0xff]
    %v1093 = vld [vmem:[#allocation10 + $0xab0] sm:$0xff]
    %v1094 = vld [vmem:[#allocation10 + $0xab8] sm:$0xff]
    %v1095 = vld [vmem:[#allocation10 + $0xac0] sm:$0xff]
    %v1096 = vld [vmem:[#allocation10 + $0xac8] sm:$0xff]
    %v1097 = vld [vmem:[#allocation10 + $0xad0] sm:$0xff]
    %v1098 = vld [vmem:[#allocation10 + $0xad8] sm:$0xff]
    %v1099 = vld [vmem:[#allocation10 + $0xae0] sm:$0xff]
    %v1100 = vld [vmem:[#allocation10 + $0xae8] sm:$0xff]
    %v1101 = vld [vmem:[#allocation10 + $0xaf0] sm:$0xff]
    %v1102 = vld [vmem:[#allocation10 + $0xaf8] sm:$0xff]
    %v1103 = vld [vmem:[#allocation10 + $0xb00] sm:$0xff]
    %v1104 = vld [vmem:[#allocation10 + $0xb08] sm:$0xff]
    %v1105 = vld [vmem:[#allocation10 + $0xb10] sm:$0xff]
    %v1106 = vld [vmem:[#allocation10 + $0xb18] sm:$0xff]
    %v1107 = vld [vmem:[#allocation10 + $0xb20] sm:$0xff]
    %v1108 = vld [vmem:[#allocation10 + $0xb28] sm:$0xff]
    %v1109 = vld [vmem:[#allocation10 + $0xb30] sm:$0xff]
    %v1110 = vld [vmem:[#allocation10 + $0xb38] sm:$0xff]
    %v1111 = vld [vmem:[#allocation10 + $0xb40] sm:$0xff]
    %v1112 = vld [vmem:[#allocation10 + $0xb48] sm:$0xff]
    %v1113 = vld [vmem:[#allocation10 + $0xb50] sm:$0xff]
    %v1114 = vld [vmem:[#allocation10 + $0xb58] sm:$0xff]
    %v1115 = vld [vmem:[#allocation10 + $0xb60] sm:$0xff]
    %v1116 = vld [vmem:[#allocation10 + $0xb68] sm:$0xff]
    %v1117 = vld [vmem:[#allocation10 + $0xb70] sm:$0xff]
    %v1118 = vld [vmem:[#allocation10 + $0xb78] sm:$0xff]
    %v1119 = vld [vmem:[#allocation10 + $0xb80] sm:$0xff]
    %v1120 = vld [vmem:[#allocation10 + $0xb88] sm:$0xff]
    %v1121 = vld [vmem:[#allocation10 + $0xb90] sm:$0xff]
    %v1122 = vld [vmem:[#allocation10 + $0xb98] sm:$0xff]
    %v1123 = vld [vmem:[#allocation10 + $0xba0] sm:$0xff]
    %v1124 = vld [vmem:[#allocation10 + $0xba8] sm:$0xff]
    %v1125 = vld [vmem:[#allocation10 + $0xbb0] sm:$0xff]
    %v1126 = vld [vmem:[#allocation10 + $0xbb8] sm:$0xff]
    %v1127 = vld [vmem:[#allocation10 + $0xbc0] sm:$0xff]
    %v1128 = vld [vmem:[#allocation10 + $0xbc8] sm:$0xff]
    %v1129 = vld [vmem:[#allocation10 + $0xbd0] sm:$0xff]
    %v1130 = vld [vmem:[#allocation10 + $0xbd8] sm:$0xff]
    %v1131 = vld [vmem:[#allocation10 + $0xbe0] sm:$0xff]
    %v1132 = vld [vmem:[#allocation10 + $0xbe8] sm:$0xff]
    %v1133 = vld [vmem:[#allocation10 + $0xbf0] sm:$0xff]
    %v1134 = vld [vmem:[#allocation10 + $0xbf8] sm:$0xff]
    %1135 = vmatprep.subr.mxu0 0.0
    %1136 = vmatpush1.msra.mxu0 %v1039
    %1137 = vmatprep.subr.mxu0 0.0
    %1138 = vmatpush1.msra.mxu0 %v1040
    %1139 = vmatprep.subr.mxu0 0.0
    %1140 = vmatpush1.msra.mxu0 %v1041
    %1141 = vmatprep.subr.mxu0 0.0
    %1142 = vmatpush1.msra.mxu0 %v1042
    %1143 = vmatprep.subr.mxu0 0.0
    %1144 = vmatpush1.msra.mxu0 %v1043
    %1145 = vmatprep.subr.mxu0 0.0
    %1146 = vmatpush1.msra.mxu0 %v1044
    %1147 = vmatprep.subr.mxu0 0.0
    %1148 = vmatpush1.msra.mxu0 %v1045
    %1149 = vmatprep.subr.mxu0 0.0
    %1150 = vmatpush1.msra.mxu0 %v1046
    %1151 = vmatprep.subr.mxu0 0.0
    %1152 = vmatpush1.msra.mxu0 %v1047
    %1153 = vmatprep.subr.mxu0 0.0
    %1154 = vmatpush1.msra.mxu0 %v1048
    %1155 = vmatprep.subr.mxu0 0.0
    %1156 = vmatpush1.msra.mxu0 %v1049
    %1157 = vmatprep.subr.mxu0 0.0
    %1158 = vmatpush1.msra.mxu0 %v1050
    %1159 = vmatprep.subr.mxu0 0.0
    %1160 = vmatpush1.msra.mxu0 %v1051
    %1161 = vmatprep.subr.mxu0 0.0
    %1162 = vmatpush1.msra.mxu0 %v1052
    %1163 = vmatprep.subr.mxu0 0.0
    %1164 = vmatpush1.msra.mxu0 %v1053
    %1165 = vmatprep.subr.mxu0 0.0
    %1166 = vmatpush1.msra.mxu0 %v1054
    %1167 = vmatprep.subr.mxu0 0.0
    %1168 = vmatpush1.msra.mxu0 %v1055
    %1169 = vmatprep.subr.mxu0 0.0
    %1170 = vmatpush1.msra.mxu0 %v1056
    %1171 = vmatprep.subr.mxu0 0.0
    %1172 = vmatpush1.msra.mxu0 %v1057
    %1173 = vmatprep.subr.mxu0 0.0
    %1174 = vmatpush1.msra.mxu0 %v1058
    %1175 = vmatprep.subr.mxu0 0.0
    %1176 = vmatpush1.msra.mxu0 %v1059
    %1177 = vmatprep.subr.mxu0 0.0
    %1178 = vmatpush1.msra.mxu0 %v1060
    %1179 = vmatprep.subr.mxu0 0.0
    %1180 = vmatpush1.msra.mxu0 %v1061
    %1181 = vmatprep.subr.mxu0 0.0
    %1182 = vmatpush1.msra.mxu0 %v1062
    %1183 = vmatprep.subr.mxu0 0.0
    %1184 = vmatpush1.msra.mxu0 %v1063
    %1185 = vmatprep.subr.mxu0 0.0
    %1186 = vmatpush1.msra.mxu0 %v1064
    %1187 = vmatprep.subr.mxu0 0.0
    %1188 = vmatpush1.msra.mxu0 %v1065
    %1189 = vmatprep.subr.mxu0 0.0
    %1190 = vmatpush1.msra.mxu0 %v1066
    %1191 = vmatprep.subr.mxu0 0.0
    %1192 = vmatpush1.msra.mxu0 %v1067
    %1193 = vmatprep.subr.mxu0 0.0
    %1194 = vmatpush1.msra.mxu0 %v1068
    %1195 = vmatprep.subr.mxu0 0.0
    %1196 = vmatpush1.msra.mxu0 %v1069
    %1197 = vmatprep.subr.mxu0 0.0
    %1198 = vmatpush1.msra.mxu0 %v1070
    %1199 = vmatprep.mubr.f32.mxu0 %v1034
    %1200 = vmatmul.mubr.f32.gmra.mrb[0].mxu0 %v1033
    %v1201 = vpop.f32.mrb[0].mxu0
    %v1202 = vadd.f32 0.0, %v1201
    %v1203 = vpop.f32.mrb[0].mxu0
    %1204 = vdwg.mxu0
    %1205 = vmatprep.subr.mxu0 0.0
    %1206 = vmatpush1.msra.mxu0 %v1071
    %1207 = vmatprep.subr.mxu0 0.0
    %1208 = vmatpush1.msra.mxu0 %v1072
    %1209 = vmatprep.subr.mxu0 0.0
    %1210 = vmatpush1.msra.mxu0 %v1073
    %1211 = vmatprep.subr.mxu0 0.0
    %1212 = vmatpush1.msra.mxu0 %v1074
    %1213 = vmatprep.subr.mxu0 0.0
    %1214 = vmatpush1.msra.mxu0 %v1075
    %1215 = vmatprep.subr.mxu0 0.0
    %1216 = vmatpush1.msra.mxu0 %v1076
    %1217 = vmatprep.subr.mxu0 0.0
    %1218 = vmatpush1.msra.mxu0 %v1077
    %1219 = vmatprep.subr.mxu0 0.0
    %1220 = vmatpush1.msra.mxu0 %v1078
    %1221 = vmatprep.subr.mxu0 0.0
    %1222 = vmatpush1.msra.mxu0 %v1079
    %1223 = vmatprep.subr.mxu0 0.0
    %1224 = vmatpush1.msra.mxu0 %v1080
    %1225 = vmatprep.subr.mxu0 0.0
    %1226 = vmatpush1.msra.mxu0 %v1081
    %1227 = vmatprep.subr.mxu0 0.0
    %1228 = vmatpush1.msra.mxu0 %v1082
    %1229 = vmatprep.subr.mxu0 0.0
    %1230 = vmatpush1.msra.mxu0 %v1083
    %1231 = vmatprep.subr.mxu0 0.0
    %1232 = vmatpush1.msra.mxu0 %v1084
    %1233 = vmatprep.subr.mxu0 0.0
    %1234 = vmatpush1.msra.mxu0 %v1085
    %1235 = vmatprep.subr.mxu0 0.0
    %1236 = vmatpush1.msra.mxu0 %v1086
    %1237 = vmatprep.subr.mxu0 0.0
    %1238 = vmatpush1.msra.mxu0 %v1087
    %1239 = vmatprep.subr.mxu0 0.0
    %1240 = vmatpush1.msra.mxu0 %v1088
    %1241 = vmatprep.subr.mxu0 0.0
    %1242 = vmatpush1.msra.mxu0 %v1089
    %1243 = vmatprep.subr.mxu0 0.0
    %1244 = vmatpush1.msra.mxu0 %v1090
    %1245 = vmatprep.subr.mxu0 0.0
    %1246 = vmatpush1.msra.mxu0 %v1091
    %1247 = vmatprep.subr.mxu0 0.0
    %1248 = vmatpush1.msra.mxu0 %v1092
    %1249 = vmatprep.subr.mxu0 0.0
    %1250 = vmatpush1.msra.mxu0 %v1093
    %1251 = vmatprep.subr.mxu0 0.0
    %1252 = vmatpush1.msra.mxu0 %v1094
    %1253 = vmatprep.subr.mxu0 0.0
    %1254 = vmatpush1.msra.mxu0 %v1095
    %1255 = vmatprep.subr.mxu0 0.0
    %1256 = vmatpush1.msra.mxu0 %v1096
    %1257 = vmatprep.subr.mxu0 0.0
    %1258 = vmatpush1.msra.mxu0 %v1097
    %1259 = vmatprep.subr.mxu0 0.0
    %1260 = vmatpush1.msra.mxu0 %v1098
    %1261 = vmatprep.subr.mxu0 0.0
    %1262 = vmatpush1.msra.mxu0 %v1099
    %1263 = vmatprep.subr.mxu0 0.0
    %1264 = vmatpush1.msra.mxu0 %v1100
    %1265 = vmatprep.subr.mxu0 0.0
    %1266 = vmatpush1.msra.mxu0 %v1101
    %1267 = vmatprep.subr.mxu0 0.0
    %1268 = vmatpush1.msra.mxu0 %v1102
    %1269 = vmatprep.mubr.f32.mxu0 %v1036
    %1270 = vmatmul.mubr.f32.gmra.mrb[0].mxu0 %v1035
    %v1271 = vpop.f32.mrb[0].mxu0
    %v1272 = vadd.f32 %v1202, %v1271
    %v1273 = vpop.f32.mrb[0].mxu0
    %1274 = vdwg.mxu0
    %1275 = vmatprep.subr.mxu0 0.0
    %1276 = vmatpush1.msra.mxu0 %v1103
    %1277 = vmatprep.subr.mxu0 0.0
    %1278 = vmatpush1.msra.mxu0 %v1104
    %1279 = vmatprep.subr.mxu0 0.0
    %1280 = vmatpush1.msra.mxu0 %v1105
    %1281 = vmatprep.subr.mxu0 0.0
    %1282 = vmatpush1.msra.mxu0 %v1106
    %1283 = vmatprep.subr.mxu0 0.0
    %1284 = vmatpush1.msra.mxu0 %v1107
    %1285 = vmatprep.subr.mxu0 0.0
    %1286 = vmatpush1.msra.mxu0 %v1108
    %1287 = vmatprep.subr.mxu0 0.0
    %1288 = vmatpush1.msra.mxu0 %v1109
    %1289 = vmatprep.subr.mxu0 0.0
    %1290 = vmatpush1.msra.mxu0 %v1110
    %1291 = vmatprep.subr.mxu0 0.0
    %1292 = vmatpush1.msra.mxu0 %v1111
    %1293 = vmatprep.subr.mxu0 0.0
    %1294 = vmatpush1.msra.mxu0 %v1112
    %1295 = vmatprep.subr.mxu0 0.0
    %1296 = vmatpush1.msra.mxu0 %v1113
    %1297 = vmatprep.subr.mxu0 0.0
    %1298 = vmatpush1.msra.mxu0 %v1114
    %1299 = vmatprep.subr.mxu0 0.0
    %1300 = vmatpush1.msra.mxu0 %v1115
    %1301 = vmatprep.subr.mxu0 0.0
    %1302 = vmatpush1.msra.mxu0 %v1116
    %1303 = vmatprep.subr.mxu0 0.0
    %1304 = vmatpush1.msra.mxu0 %v1117
    %1305 = vmatprep.subr.mxu0 0.0
    %1306 = vmatpush1.msra.mxu0 %v1118
    %1307 = vmatprep.subr.mxu0 0.0
    %1308 = vmatpush1.msra.mxu0 %v1119
    %1309 = vmatprep.subr.mxu0 0.0
    %1310 = vmatpush1.msra.mxu0 %v1120
    %1311 = vmatprep.subr.mxu0 0.0
    %1312 = vmatpush1.msra.mxu0 %v1121
    %1313 = vmatprep.subr.mxu0 0.0
    %1314 = vmatpush1.msra.mxu0 %v1122
    %1315 = vmatprep.subr.mxu0 0.0
    %1316 = vmatpush1.msra.mxu0 %v1123
    %1317 = vmatprep.subr.mxu0 0.0
    %1318 = vmatpush1.msra.mxu0 %v1124
    %1319 = vmatprep.subr.mxu0 0.0
    %1320 = vmatpush1.msra.mxu0 %v1125
    %1321 = vmatprep.subr.mxu0 0.0
    %1322 = vmatpush1.msra.mxu0 %v1126
    %1323 = vmatprep.subr.mxu0 0.0
    %1324 = vmatpush1.msra.mxu0 %v1127
    %1325 = vmatprep.subr.mxu0 0.0
    %1326 = vmatpush1.msra.mxu0 %v1128
    %1327 = vmatprep.subr.mxu0 0.0
    %1328 = vmatpush1.msra.mxu0 %v1129
    %1329 = vmatprep.subr.mxu0 0.0
    %1330 = vmatpush1.msra.mxu0 %v1130
    %1331 = vmatprep.subr.mxu0 0.0
    %1332 = vmatpush1.msra.mxu0 %v1131
    %1333 = vmatprep.subr.mxu0 0.0
    %1334 = vmatpush1.msra.mxu0 %v1132
    %1335 = vmatprep.subr.mxu0 0.0
    %1336 = vmatpush1.msra.mxu0 %v1133
    %1337 = vmatprep.subr.mxu0 0.0
    %1338 = vmatpush1.msra.mxu0 %v1134
    %1339 = vmatprep.mubr.f32.mxu0 %v1038
    %1340 = vmatmul.mubr.f32.gmra.mrb[0].mxu0 %v1037
    %v1341 = vpop.f32.mrb[0].mxu0
    %v1342 = vadd.f32 %v1272, %v1341
    %v1343 = vpop.f32.mrb[0].mxu0
    %1344 = vdwg.mxu0
    %v1345 = vadd.f32 %v1032, %v1342
    %v1346 = vld [vmem:[#allocation11] sm:$0x1]
    %v1348 = vlaneseq
    %v1349 = vshrl.u32 %v1348, 7
    %v1350 = vsub.s32 0, %v1349
    %v1351 = vrot.slane %v1346, %v1350
    %v1353 = vadd.f32 %v1345, %v1351
    %v1354 = vlaneseq
    %v1355 = vand.u32 %v1354, 127
    %vm1356 = vcmp.lt.s32.totalorder %v1355, 6
    %v1357 = vxor.u32 %v1353, 2147483648
    %v1358 = vmul.f32 %v1357, 1.442695
    %v1359 = vpow.pop %v1358
    %v1360 = vadd.f32 %v1359, 1.0
    %v1361 = vrcp.pop %v1360
    %v1362 = vmul.f32 1.0, %v1361
    %v1363 = vsel %vm1356, %v1362, %v1353
    %1364 = vst [vmem:[#allocation13] sm:$0xff] %v1363
    // Predicated region
    $region50: #{tpu_custom_call.1} parent=1 // pred_check
      _
    $region51: #{tpu_custom_call.1} parent=1 // pred_check_branch
      %1366 = sbr.rel (0) target = $region53
    $region52: #{tpu_custom_call.1} parent=1 // pred_region
      %s1368 = ssub.s32 128, 128
      %1369 = vsyncadd [#allocation4], %s1368
      %s1371 = sshll.u32 [#allocation13], 4
      %s1372 = int_to_ptr.vmem [resolvable:$true] %s1371
      %1374 = dma.vmem_to_hbm [thread:$0]  %s1372, 128, %s6, [#allocation4]
    $region53: #{tpu_custom_call.1} parent=1 // pred_fallthru
      _
    // Predicated region
    $region54: #{tpu_custom_call.1} parent=1 // pred_check
      _
    $region55: #{tpu_custom_call.1} parent=1 // pred_check_branch
      %1376 = sbr.rel (0) target = $region57
    $region56: #{tpu_custom_call.1} parent=1 // pred_region
      %1377 = dma.done [#allocation4], 128
    $region57: #{tpu_custom_call.1} parent=1 // pred_fallthru
      _
    %1378 = vsyncpa [#allocation3], 1
    %1379 = vsyncpa [#allocation6], 1
    %1380 = vsyncpa [#allocation9], 1
    %1381 = vsyncpa [#allocation12], 1
    %1382 = vsyncpa [#allocation4], 1

</llo_original>
